<compile_context>
chip_gen: v5e
topology: v5e:2x2
jax: 0.10.0
libtpu: 0.0.40
codegen_flags: <defaults>
</compile_context>

<pallas_src>
import jax
import jax.numpy as jnp
from jax.experimental import pallas as pl
from jax.experimental.pallas import tpu as pltpu


def _sage_classifier_kernel(adj_ref, feat_k_ref, feat_i_ref,
                            w_self_ref, w_neigh_ref, w_mlp_ref, b_mlp_ref,
                            out_ref, neigh_acc, deg_acc):
    k = pl.program_id(1)

    @pl.when(k == 0)
    def _init():
        neigh_acc[...] = jnp.zeros_like(neigh_acc)
        deg_acc[...] = jnp.zeros_like(deg_acc)

    adj_blk = adj_ref[...]                                        # (TM, TK) bf16, 0/1
    # Partial neighbor aggregation (bf16 MXU, f32 accumulate) + degree row-sum.
    neigh_acc[...] += jnp.dot(adj_blk, feat_k_ref[...],
                              preferred_element_type=jnp.float32)
    deg_acc[...] += jnp.sum(adj_blk.astype(jnp.float32), axis=1, keepdims=True)

    @pl.when(k == pl.num_programs(1) - 1)
    def _finalize():
        inv_deg = pl.reciprocal(deg_acc[...] + 1.0, approx=True)  # (TM, 1), EUP
        neigh = (neigh_acc[...] * inv_deg).astype(jnp.bfloat16)   # (TM, F_pad)

        # proj([x, neigh]) split into two matmuls (avoids a lane concat).
        h = jnp.dot(feat_i_ref[...], w_self_ref[...],
                    preferred_element_type=jnp.float32)
        h = h + jnp.dot(neigh, w_neigh_ref[...],
                        preferred_element_type=jnp.float32)
        h = jnp.maximum(h, 0.0)                                   # ReLU
        # TODO(synk): stochastic dropout (training mode) via pltpu.prng_random_bits.

        out = jnp.dot(h, w_mlp_ref[...], preferred_element_type=jnp.float32)
        out_ref[...] = out + b_mlp_ref[...]


def _round_up(n, m):
    return ((n + m - 1) // m) * m


def _pad2d(a, rows, cols):
    return jnp.pad(a, ((0, rows - a.shape[0]), (0, cols - a.shape[1])))


def sage_classifier_forward(params, x, adj, *, tile_n=128):
    """Sage_Classifier.forward (inference) as a single fused Pallas kernel.

    x:   (N, nembed) float32
    adj: (N, N)      float32 dense 0/1 adjacency
    """
    n, f_in = x.shape
    nhid = params["w_self"].shape[1]
    nclass = params["w_mlp"].shape[1]

    assert tile_n % 128 == 0
    tm = tk = tile_n
    n_pad = _round_up(max(n, tile_n), tile_n)
    f_pad = _round_up(f_in, 128)
    h_pad = _round_up(nhid, 128)
    c_pad = _round_up(nclass, 128)

    # Zero padding keeps the math exact: padded adj rows/cols are zero, padded
    # feature / hidden / class columns are zero in activations and weights.
    adj_p = _pad2d(adj, n_pad, n_pad).astype(jnp.bfloat16)          # 0/1 -> lossless
    x_p = _pad2d(x, n_pad, f_pad).astype(jnp.bfloat16)
    w_self_p = _pad2d(params["w_self"], f_pad, h_pad).astype(jnp.bfloat16)
    w_neigh_p = _pad2d(params["w_neigh"], f_pad, h_pad).astype(jnp.bfloat16)
    w_mlp_p = _pad2d(params["w_mlp"], h_pad, c_pad).astype(jnp.float32)
    b_mlp_p = jnp.pad(params["b_mlp"], (0, c_pad - nclass)).astype(jnp.float32)
    b_mlp_p = b_mlp_p.reshape(1, c_pad)

    grid = (n_pad // tm, n_pad // tk)                               # rows, adj-K

    out_p = pl.pallas_call(
        _sage_classifier_kernel,
        out_shape=jax.ShapeDtypeStruct((n_pad, c_pad), jnp.float32),
        grid_spec=pltpu.PrefetchScalarGridSpec(
            num_scalar_prefetch=0,
            grid=grid,
            in_specs=[
                pl.BlockSpec((tm, tk), lambda i, k: (i, k)),        # adj tile
                pl.BlockSpec((tk, f_pad), lambda i, k: (k, 0)),     # x rows (aggregation)
                pl.BlockSpec((tm, f_pad), lambda i, k: (i, 0)),     # x rows (self term)
                pl.BlockSpec((f_pad, h_pad), lambda i, k: (0, 0)),  # W_self
                pl.BlockSpec((f_pad, h_pad), lambda i, k: (0, 0)),  # W_neigh
                pl.BlockSpec((h_pad, c_pad), lambda i, k: (0, 0)),  # W_mlp
                pl.BlockSpec((1, c_pad), lambda i, k: (0, 0)),      # b_mlp
            ],
            out_specs=pl.BlockSpec((tm, c_pad), lambda i, k: (i, 0)),
            scratch_shapes=[
                pltpu.VMEM((tm, f_pad), jnp.float32),               # neigh accumulator
                pltpu.VMEM((tm, 1), jnp.float32),                   # degree accumulator
            ],
        ),
        compiler_params=pltpu.CompilerParams(
            dimension_semantics=("parallel", "arbitrary"),
        ),
    )(adj_p, x_p, x_p, w_self_p, w_neigh_p, w_mlp_p, b_mlp_p)

    return out_p[:n, :nclass]


def init_sage_classifier_params(key, nembed, nhid, nclass):
    """Mirror PyTorch init: sage1.proj.weight ~ N(0,1) with shape (nhid, 2*nembed),
    mlp.weight ~ N(0, 0.05); mlp.bias keeps nn.Linear's default uniform init.
    Weights are stored pre-transposed for row-major matmuls on the MXU."""
    k1, k2, k3 = jax.random.split(key, 3)
    w_sage = jax.random.normal(k1, (nhid, 2 * nembed), dtype=jnp.float32)
    w_mlp = 0.05 * jax.random.normal(k2, (nclass, nhid), dtype=jnp.float32)
    bound = 1.0 / (nhid ** 0.5)
    b_mlp = jax.random.uniform(k3, (nclass,), minval=-bound, maxval=bound,
                               dtype=jnp.float32)
    return {
        "w_self": w_sage[:, :nembed].T,    # (nembed, nhid)
        "w_neigh": w_sage[:, nembed:].T,   # (nembed, nhid)
        "w_mlp": w_mlp.T,                  # (nhid, nclass)
        "b_mlp": b_mlp,                    # (nclass,)
    }


def _reference_forward(params, x, adj):
    """Pure-JAX reference mirroring the PyTorch module at the kernel's
    (bf16-operand, f32-accumulate) precision."""
    q = lambda a: a.astype(jnp.bfloat16).astype(jnp.float32)
    xq, aq = q(x), q(adj)
    deg = aq.sum(axis=1, keepdims=True) + 1.0
    neigh = q((aq @ xq) / deg)             # kernel feeds neigh to the MXU as bf16
    h = jnp.maximum(xq @ q(params["w_self"]) + neigh @ q(params["w_neigh"]), 0.0)
    return h @ params["w_mlp"] + params["b_mlp"][None, :]


if __name__ == "__main__":
    # Small shapes consistent with the module: N nodes, nembed -> nhid -> nclass.
    # Chosen so padding (to 128 lanes) and the 2x2 tiled grid are both exercised.
    N, NEMBED, NHID, NCLASS = 200, 96, 64, 10

    key = jax.random.PRNGKey(0)
    kx, kadj, kp = jax.random.split(key, 3)

    x = jax.random.normal(kx, (N, NEMBED), dtype=jnp.float32)
    adj = (jax.random.uniform(kadj, (N, N)) < 0.1).astype(jnp.float32)
    params = init_sage_classifier_params(kp, NEMBED, NHID, NCLASS)

    out = jax.block_until_ready(jax.jit(sage_classifier_forward)(params, x, adj))

    ref = _reference_forward(params, x, adj)
    assert out.shape == (N, NCLASS), out.shape
    max_err = float(jnp.max(jnp.abs(out - ref)))
    assert jnp.allclose(out, ref, atol=2e-2, rtol=2e-2), f"max |err| = {max_err}"
    print("KERNEL_OK")
</pallas_src>

<mosaic_0001>
module attributes {stable_mosaic.version = 11 : i64} {
  func.func @_sage_classifier_kernel(%arg0: i32, %arg1: i32, %arg2: memref<128x128xbf16, #tpu.memory_space<vmem>>, %arg3: memref<128x128xbf16, #tpu.memory_space<vmem>>, %arg4: memref<128x128xbf16, #tpu.memory_space<vmem>>, %arg5: memref<128x128xbf16, #tpu.memory_space<vmem>>, %arg6: memref<128x128xbf16, #tpu.memory_space<vmem>>, %arg7: memref<128x128xf32, #tpu.memory_space<vmem>>, %arg8: memref<1x128xf32, #tpu.memory_space<vmem>>, %arg9: memref<128x128xf32, #tpu.memory_space<vmem>>, %arg10: memref<128x128xf32, #tpu.memory_space<vmem>>, %arg11: memref<128x1xf32, #tpu.memory_space<vmem>>) attributes {dimension_semantics = [#tpu.dimension_semantics<parallel>, #tpu.dimension_semantics<arbitrary>], iteration_bounds = array<i64: 2, 2>, scalar_prefetch = 0 : i64, scratch_operands = 2 : i64, tpu.core_type = #tpu.core_type<tc>, window_params = [{transform_indices = @transform_0, window_bounds = array<i64: 128, 128>}, {transform_indices = @transform_1, window_bounds = array<i64: 128, 128>}, {transform_indices = @transform_2, window_bounds = array<i64: 128, 128>}, {pipeline_mode = #tpu.pipeline_mode<synchronous>, transform_indices = @transform_3, window_bounds = array<i64: 128, 128>}, {pipeline_mode = #tpu.pipeline_mode<synchronous>, transform_indices = @transform_4, window_bounds = array<i64: 128, 128>}, {pipeline_mode = #tpu.pipeline_mode<synchronous>, transform_indices = @transform_5, window_bounds = array<i64: 128, 128>}, {pipeline_mode = #tpu.pipeline_mode<synchronous>, transform_indices = @transform_6, window_bounds = array<i64: 1, 128>}, {transform_indices = @transform_7, window_bounds = array<i64: 128, 128>}]} {
    %c0_i32 = arith.constant 0 : i32
    %0 = arith.cmpi eq, %arg1, %c0_i32 : i32
    %1 = arith.extui %0 : i1 to i32
    %c0_i32_0 = arith.constant 0 : i32
    %2 = arith.cmpi ne, %1, %c0_i32_0 : i32
    scf.if %2 {
      %cst_14 = arith.constant 0.000000e+00 : f32
      %18 = vector.broadcast %cst_14 : f32 to vector<128x128xf32>
      %c0_15 = arith.constant 0 : index
      %c0_16 = arith.constant 0 : index
      %19 = vector.load %arg10[%c0_15, %c0_16] : memref<128x128xf32, #tpu.memory_space<vmem>>, vector<128x128xf32>
      tpu.vector_store %arg10[%c0_15, %c0_16], %18 {strides = array<i32>} : memref<128x128xf32, #tpu.memory_space<vmem>>, vector<128x128xf32>,
      %cst_17 = arith.constant 0.000000e+00 : f32
      %20 = vector.broadcast %cst_17 : f32 to vector<128x1xf32>
      %c0_18 = arith.constant 0 : index
      %c0_19 = arith.constant 0 : index
      %21 = vector.load %arg11[%c0_18, %c0_19] : memref<128x1xf32, #tpu.memory_space<vmem>>, vector<128x1xf32>
      tpu.vector_store %arg11[%c0_18, %c0_19], %20 {strides = array<i32>} : memref<128x1xf32, #tpu.memory_space<vmem>>, vector<128x1xf32>,
    } else {
    }
    %c0 = arith.constant 0 : index
    %c0_1 = arith.constant 0 : index
    %3 = vector.load %arg2[%c0, %c0_1] : memref<128x128xbf16, #tpu.memory_space<vmem>>, vector<128x128xbf16>
    %c0_2 = arith.constant 0 : index
    %c0_3 = arith.constant 0 : index
    %4 = vector.load %arg10[%c0_2, %c0_3] : memref<128x128xf32, #tpu.memory_space<vmem>>, vector<128x128xf32>
    %c0_4 = arith.constant 0 : index
    %c0_5 = arith.constant 0 : index
    %5 = vector.load %arg3[%c0_4, %c0_5] : memref<128x128xbf16, #tpu.memory_space<vmem>>, vector<128x128xbf16>
    %cst = arith.constant dense<0.000000e+00> : vector<128x128xf32>
    %6 = tpu.matmul %3, %5, %cst {dimension_numbers = #tpu.dot_dimension_numbers<[1], [0], [0], [1], [0, 0, 1, 1], [], []>} : vector<128x128xbf16>, vector<128x128xbf16>, vector<128x128xf32> -> vector<128x128xf32>
    %7 = arith.addf %4, %6 : vector<128x128xf32>
    %c0_6 = arith.constant 0 : index
    %c0_7 = arith.constant 0 : index
    %8 = vector.load %arg10[%c0_6, %c0_7] : memref<128x128xf32, #tpu.memory_space<vmem>>, vector<128x128xf32>
    tpu.vector_store %arg10[%c0_6, %c0_7], %7 {strides = array<i32>} : memref<128x128xf32, #tpu.memory_space<vmem>>, vector<128x128xf32>,
    %c0_8 = arith.constant 0 : index
    %c0_9 = arith.constant 0 : index
    %9 = vector.load %arg11[%c0_8, %c0_9] : memref<128x1xf32, #tpu.memory_space<vmem>>, vector<128x1xf32>
    %10 = arith.extf %3 : vector<128x128xbf16> to vector<128x128xf32>
    %cst_10 = arith.constant dense<0.000000e+00> : vector<128xf32>
    %11 = vector.multi_reduction <add>, %10, %cst_10 [1] : vector<128x128xf32> to vector<128xf32>
    %12 = vector.shape_cast %11 : vector<128xf32> to vector<128x1xf32>
    %13 = arith.addf %9, %12 : vector<128x1xf32>
    %c0_11 = arith.constant 0 : index
    %c0_12 = arith.constant 0 : index
    %14 = vector.load %arg11[%c0_11, %c0_12] : memref<128x1xf32, #tpu.memory_space<vmem>>, vector<128x1xf32>
    tpu.vector_store %arg11[%c0_11, %c0_12], %13 {strides = array<i32>} : memref<128x1xf32, #tpu.memory_space<vmem>>, vector<128x1xf32>,
    %c1_i32 = arith.constant 1 : i32
    %15 = arith.cmpi eq, %arg1, %c1_i32 : i32
    %16 = arith.extui %15 : i1 to i32
    %c0_i32_13 = arith.constant 0 : i32
    %17 = arith.cmpi ne, %16, %c0_i32_13 : i32
    scf.if %17 {
      %c0_14 = arith.constant 0 : index
      %c0_15 = arith.constant 0 : index
      %18 = vector.load %arg11[%c0_14, %c0_15] : memref<128x1xf32, #tpu.memory_space<vmem>>, vector<128x1xf32>
      %cst_16 = arith.constant 1.000000e+00 : f32
      %19 = vector.broadcast %cst_16 : f32 to vector<128x1xf32>
      %20 = arith.addf %18, %19 : vector<128x1xf32>
      %21 = tpu.reciprocal %20 {approx = true} : vector<128x1xf32> -> vector<128x1xf32>
      %c0_17 = arith.constant 0 : index
      %c0_18 = arith.constant 0 : index
      %22 = vector.load %arg10[%c0_17, %c0_18] : memref<128x128xf32, #tpu.memory_space<vmem>>, vector<128x128xf32>
      %23 = vector.broadcast %21 : vector<128x1xf32> to vector<128x128xf32>
      %24 = arith.mulf %22, %23 : vector<128x128xf32>
      %25 = arith.truncf %24 : vector<128x128xf32> to vector<128x128xbf16>
      %c0_19 = arith.constant 0 : index
      %c0_20 = arith.constant 0 : index
      %26 = vector.load %arg4[%c0_19, %c0_20] : memref<128x128xbf16, #tpu.memory_space<vmem>>, vector<128x128xbf16>
      %c0_21 = arith.constant 0 : index
      %c0_22 = arith.constant 0 : index
      %27 = vector.load %arg5[%c0_21, %c0_22] : memref<128x128xbf16, #tpu.memory_space<vmem>>, vector<128x128xbf16>
      %cst_23 = arith.constant dense<0.000000e+00> : vector<128x128xf32>
      %28 = tpu.matmul %26, %27, %cst_23 {dimension_numbers = #tpu.dot_dimension_numbers<[1], [0], [0], [1], [0, 0, 1, 1], [], []>} : vector<128x128xbf16>, vector<128x128xbf16>, vector<128x128xf32> -> vector<128x128xf32>
      %c0_24 = arith.constant 0 : index
      %c0_25 = arith.constant 0 : index
      %29 = vector.load %arg6[%c0_24, %c0_25] : memref<128x128xbf16, #tpu.memory_space<vmem>>, vector<128x128xbf16>
      %cst_26 = arith.constant dense<0.000000e+00> : vector<128x128xf32>
      %30 = tpu.matmul %25, %29, %cst_26 {dimension_numbers = #tpu.dot_dimension_numbers<[1], [0], [0], [1], [0, 0, 1, 1], [], []>} : vector<128x128xbf16>, vector<128x128xbf16>, vector<128x128xf32> -> vector<128x128xf32>
      %31 = arith.addf %28, %30 : vector<128x128xf32>
      %cst_27 = arith.constant 0.000000e+00 : f32
      %32 = vector.broadcast %cst_27 : f32 to vector<128x128xf32>
      %33 = arith.maximumf %31, %32 : vector<128x128xf32>
      %c0_28 = arith.constant 0 : index
      %c0_29 = arith.constant 0 : index
      %34 = vector.load %arg7[%c0_28, %c0_29] : memref<128x128xf32, #tpu.memory_space<vmem>>, vector<128x128xf32>
      %cst_30 = arith.constant dense<0.000000e+00> : vector<128x128xf32>
      %35 = tpu.matmul %33, %34, %cst_30 {dimension_numbers = #tpu.dot_dimension_numbers<[1], [0], [0], [1], [0, 0, 1, 1], [], []>} : vector<128x128xf32>, vector<128x128xf32>, vector<128x128xf32> -> vector<128x128xf32>
      %c0_31 = arith.constant 0 : index
      %c0_32 = arith.constant 0 : index
      %36 = vector.load %arg8[%c0_31, %c0_32] : memref<1x128xf32, #tpu.memory_space<vmem>>, vector<1x128xf32>
      %37 = vector.broadcast %36 : vector<1x128xf32> to vector<128x128xf32>
      %38 = arith.addf %35, %37 : vector<128x128xf32>
      %c0_33 = arith.constant 0 : index
      %c0_34 = arith.constant 0 : index
      %39 = vector.load %arg9[%c0_33, %c0_34] : memref<128x128xf32, #tpu.memory_space<vmem>>, vector<128x128xf32>
      tpu.vector_store %arg9[%c0_33, %c0_34], %38 {strides = array<i32>} : memref<128x128xf32, #tpu.memory_space<vmem>>, vector<128x128xf32>,
    } else {
    }
    return
  }
  func.func @transform_0(%arg0: i32, %arg1: i32) -> (i32, i32) {
    %c0_i32 = arith.constant 0 : i32
    return %arg0, %arg1 : i32, i32
  }
  func.func @transform_1(%arg0: i32, %arg1: i32) -> (i32, i32) {
    %c0_i32 = arith.constant 0 : i32
    %c0_i32_0 = arith.constant 0 : i32
    return %arg1, %c0_i32 : i32, i32
  }
  func.func @transform_2(%arg0: i32, %arg1: i32) -> (i32, i32) {
    %c0_i32 = arith.constant 0 : i32
    %c0_i32_0 = arith.constant 0 : i32
    return %arg0, %c0_i32 : i32, i32
  }
  func.func @transform_3(%arg0: i32, %arg1: i32) -> (i32, i32) {
    %c0_i32 = arith.constant 0 : i32
    %c0_i32_0 = arith.constant 0 : i32
    %c0_i32_1 = arith.constant 0 : i32
    return %c0_i32, %c0_i32_0 : i32, i32
  }
  func.func @transform_4(%arg0: i32, %arg1: i32) -> (i32, i32) {
    %c0_i32 = arith.constant 0 : i32
    %c0_i32_0 = arith.constant 0 : i32
    %c0_i32_1 = arith.constant 0 : i32
    return %c0_i32, %c0_i32_0 : i32, i32
  }
  func.func @transform_5(%arg0: i32, %arg1: i32) -> (i32, i32) {
    %c0_i32 = arith.constant 0 : i32
    %c0_i32_0 = arith.constant 0 : i32
    %c0_i32_1 = arith.constant 0 : i32
    return %c0_i32, %c0_i32_0 : i32, i32
  }
  func.func @transform_6(%arg0: i32, %arg1: i32) -> (i32, i32) {
    %c0_i32 = arith.constant 0 : i32
    %c0_i32_0 = arith.constant 0 : i32
    %c0_i32_1 = arith.constant 0 : i32
    return %c0_i32, %c0_i32_0 : i32, i32
  }
  func.func @transform_7(%arg0: i32, %arg1: i32) -> (i32, i32) {
    %c0_i32 = arith.constant 0 : i32
    %c0_i32_0 = arith.constant 0 : i32
    return %arg0, %c0_i32 : i32, i32
  }
}

</mosaic_0001>

<llo_original>
// kernel: sage_classifier_forward.1
$region0: #{sage_classifier_forward.1}
  #allocation0 [shape = 'u32[]', space=smem, size = 0x4, offset = 0x4, fixed_abs, tag = 'smem constant byte address 0x4 - core index']
  #allocation1 [shape = 'u32[72,128]{1,0:T(1,128)}', space=vmem, size = 0x9000, scoped, tag = 'internal scratch']
  #allocation2 [shape = 'f32[128,128]{1,0:T(8,128)}', space=vmem, size = 0x10000, scoped, tag = 'scratch operand']
  #allocation3 [shape = 'f32[128,1]{1,0:T(8,128)}', space=vmem, size = 0x10000, scoped, tag = 'scratch operand']
  %s0 = inlined_call_operand.vmem [shape: bf16[256,256], index: 0, kind: input, shape index: {}]
  %s1 = inlined_call_operand.vmem [shape: bf16[256,128], index: 1, kind: input, shape index: {}, may-alias: {1,2}]
  %s2 = inlined_call_operand.vmem [shape: bf16[256,128], index: 2, kind: input, shape index: {}, may-alias: {1,2}]
  %s3 = inlined_call_operand.vmem [shape: bf16[128,128], index: 3, kind: input, shape index: {}]
  %s4 = inlined_call_operand.vmem [shape: bf16[128,128], index: 4, kind: input, shape index: {}]
  %s5 = inlined_call_operand.vmem [shape: f32[128,128], index: 5, kind: input, shape index: {}]
  %s6 = inlined_call_operand.vmem [shape: f32[1,128], index: 6, kind: input, shape index: {}]
  %s7 = inlined_call_operand.vmem [shape: f32[256,128], index: 7, kind: output, shape index: {}]
  %s8 = sld [smem:[#allocation0]]
  $region110: #{sage_classifier_forward.1} parent=0
    _
  %s10 = ssub.s32 1, %s8
  %s11 = scalar_select 0, %s10, %s8
  $region1: #{sage_classifier_forward.1} parent=0
    #allocation4 [shape = 'u8[65536]{0}', space=vmem, size = 0x10000, scoped, tag = 'input window, operand 0']
    loop: start=0, step=1, limit=6
    $region2: #{sage_classifier_forward.1} parent=1 // loop_pre_header
      _
    $region3: #{sage_classifier_forward.1} parent=1 // loop_header
      %s13 = sphi 0, %s17
      %p14 = scmp.ge.s32.totalorder %s13, 6
      %s20 = sphi 0, %s32
      %s21 = sphi 0, %s28
      %s22 = sphi 0, %s20
      %s23 = sphi 0, %s21
      %s24 = sphi 0, %s22
      %s25 = sphi 0, %s23
      %s37 = sphi 0, %s39
      %s40 = sphi 0, %s37
      %s41 = sphi 0, %s40
      %s57 = sphi 0, %s41
      %s63 = sphi 0, %s65
      %s66 = sphi 0, %s63
      %s67 = sphi 0, %s66
      %s83 = sphi 0, %s67
      %s89 = sphi 0, %s91
      %s92 = sphi 0, %s89
      %s93 = sphi 0, %s92
      %s109 = sphi 0, %s93
      %s113 = sphi 0, %s113
      %s115 = sphi 0, %s113
      %s116 = sphi 0, %s115
      %s130 = sphi 0, %s116
      %s134 = sphi 0, %s134
      %s136 = sphi 0, %s134
      %s137 = sphi 0, %s136
      %s151 = sphi 0, %s137
      %s155 = sphi 0, %s155
      %s157 = sphi 0, %s155
      %s158 = sphi 0, %s157
      %s172 = sphi 0, %s158
      %s176 = sphi 0, %s176
      %s178 = sphi 0, %s176
      %s179 = sphi 0, %s178
      %s193 = sphi 0, %s179
      %s199 = sphi 0, %s201
      %s202 = sphi 0, %s199
      %s203 = sphi 0, %s202
      %s219 = sphi 0, %s203
    $region4: #{sage_classifier_forward.1} parent=1 // loop_header_branch
      %16 = sbr.rel (%p14) target = $region8
    $region5: #{sage_classifier_forward.1} parent=1 // loop_body
      %s18 = ssub.s32 %s13, 1
      %s19 = ssub.s32 %s13, 2
      %s26 = sadd.s32 1, %s21
      %p27 = scmp.ge.s32.totalorder %s26, 2
      %s28 = scalar_select %p27, 0, %s26
      %s29 = sadd.s32 1, %s20
      %s30 = scalar_select %p27, %s29, %s20
      %p31 = scmp.ge.s32.totalorder %s30, 2
      %s32 = scalar_select %p31, 0, %s30
      %s33 = ssub.s32 %s20, %s32
      %s34 = ssub.s32 %s21, %s28
      %s35 = sor.u32 %s33, %s34
      %p36 = scmp.eq.s32.totalorder %s35, 0
      %s38 = sadd.s32 %s37, 1
      %s39 = scalar_select %p36, %s37, %s38
      %p42 = pneg %p36
      %p43 = scmp.eq.s32.totalorder %s13, 3
      %p44 = por %p42, %p43
      %p45 = scmp.ne.s32.totalorder %s37, %s40
      %p46 = scmp.eq.s32.totalorder %s13, 0
      %p47 = por %p45, %p46
      %p48 = scmp.ne.s32.totalorder %s37, %s40
      %p49 = scmp.eq.s32.totalorder %s18, 3
      %p50 = por %p48, %p49
      %p51 = scmp.ne.s32.totalorder %s40, %s41
      %p52 = scmp.eq.s32.totalorder %s18, 0
      %p53 = por %p51, %p52
      %p54 = scmp.ne.s32.totalorder %s40, %s41
      %p55 = scmp.eq.s32.totalorder %s19, 3
      %p56 = por %p54, %p55
      %p58 = scmp.ne.s32.totalorder %s41, %s57
      %p59 = scmp.eq.s32.totalorder %s19, 0
      %p60 = por %p58, %p59
      %s61 = ssub.s32 %s21, %s28
      %p62 = scmp.eq.s32.totalorder %s61, 0
      %s64 = sadd.s32 %s63, 1
      %s65 = scalar_select %p62, %s63, %s64
      %p68 = pneg %p62
      %p69 = scmp.eq.s32.totalorder %s13, 3
      %p70 = por %p68, %p69
      %p71 = scmp.ne.s32.totalorder %s63, %s66
      %p72 = scmp.eq.s32.totalorder %s13, 0
      %p73 = por %p71, %p72
      %p74 = scmp.ne.s32.totalorder %s63, %s66
      %p75 = scmp.eq.s32.totalorder %s18, 3
      %p76 = por %p74, %p75
      %p77 = scmp.ne.s32.totalorder %s66, %s67
      %p78 = scmp.eq.s32.totalorder %s18, 0
      %p79 = por %p77, %p78
      %p80 = scmp.ne.s32.totalorder %s66, %s67
      %p81 = scmp.eq.s32.totalorder %s19, 3
      %p82 = por %p80, %p81
      %p84 = scmp.ne.s32.totalorder %s67, %s83
      %p85 = scmp.eq.s32.totalorder %s19, 0
      %p86 = por %p84, %p85
      %s87 = ssub.s32 %s20, %s32
      %p88 = scmp.eq.s32.totalorder %s87, 0
      %s90 = sadd.s32 %s89, 1
      %s91 = scalar_select %p88, %s89, %s90
      %p94 = pneg %p88
      %p95 = scmp.eq.s32.totalorder %s13, 3
      %p96 = por %p94, %p95
      %p97 = scmp.ne.s32.totalorder %s89, %s92
      %p98 = scmp.eq.s32.totalorder %s13, 0
      %p99 = por %p97, %p98
      %p100 = scmp.ne.s32.totalorder %s89, %s92
      %p101 = scmp.eq.s32.totalorder %s18, 3
      %p102 = por %p100, %p101
      %p103 = scmp.ne.s32.totalorder %s92, %s93
      %p104 = scmp.eq.s32.totalorder %s18, 0
      %p105 = por %p103, %p104
      %p106 = scmp.ne.s32.totalorder %s92, %s93
      %p107 = scmp.eq.s32.totalorder %s19, 3
      %p108 = por %p106, %p107
      %p110 = scmp.ne.s32.totalorder %s93, %s109
      %p111 = scmp.eq.s32.totalorder %s19, 0
      %p112 = por %p110, %p111
      %s114 = sadd.s32 %s113, 1
      %p117 = scmp.eq.s32.totalorder %s13, 3
      %p118 = scmp.ne.s32.totalorder %s113, %s115
      %p119 = scmp.eq.s32.totalorder %s13, 0
      %p120 = por %p118, %p119
      %p121 = scmp.ne.s32.totalorder %s113, %s115
      %p122 = scmp.eq.s32.totalorder %s18, 3
      %p123 = por %p121, %p122
      %p124 = scmp.ne.s32.totalorder %s115, %s116
      %p125 = scmp.eq.s32.totalorder %s18, 0
      %p126 = por %p124, %p125
      %p127 = scmp.ne.s32.totalorder %s115, %s116
      %p128 = scmp.eq.s32.totalorder %s19, 3
      %p129 = por %p127, %p128
      %p131 = scmp.ne.s32.totalorder %s116, %s130
      %p132 = scmp.eq.s32.totalorder %s19, 0
      %p133 = por %p131, %p132
      %s135 = sadd.s32 %s134, 1
      %p138 = scmp.eq.s32.totalorder %s13, 3
      %p139 = scmp.ne.s32.totalorder %s134, %s136
      %p140 = scmp.eq.s32.totalorder %s13, 0
      %p141 = por %p139, %p140
      %p142 = scmp.ne.s32.totalorder %s134, %s136
      %p143 = scmp.eq.s32.totalorder %s18, 3
      %p144 = por %p142, %p143
      %p145 = scmp.ne.s32.totalorder %s136, %s137
      %p146 = scmp.eq.s32.totalorder %s18, 0
      %p147 = por %p145, %p146
      %p148 = scmp.ne.s32.totalorder %s136, %s137
      %p149 = scmp.eq.s32.totalorder %s19, 3
      %p150 = por %p148, %p149
      %p152 = scmp.ne.s32.totalorder %s137, %s151
      %p153 = scmp.eq.s32.totalorder %s19, 0
      %p154 = por %p152, %p153
      %s156 = sadd.s32 %s155, 1
      %p159 = scmp.eq.s32.totalorder %s13, 3
      %p160 = scmp.ne.s32.totalorder %s155, %s157
      %p161 = scmp.eq.s32.totalorder %s13, 0
      %p162 = por %p160, %p161
      %p163 = scmp.ne.s32.totalorder %s155, %s157
      %p164 = scmp.eq.s32.totalorder %s18, 3
      %p165 = por %p163, %p164
      %p166 = scmp.ne.s32.totalorder %s157, %s158
      %p167 = scmp.eq.s32.totalorder %s18, 0
      %p168 = por %p166, %p167
      %p169 = scmp.ne.s32.totalorder %s157, %s158
      %p170 = scmp.eq.s32.totalorder %s19, 3
      %p171 = por %p169, %p170
      %p173 = scmp.ne.s32.totalorder %s158, %s172
      %p174 = scmp.eq.s32.totalorder %s19, 0
      %p175 = por %p173, %p174
      %s177 = sadd.s32 %s176, 1
      %p180 = scmp.eq.s32.totalorder %s13, 3
      %p181 = scmp.ne.s32.totalorder %s176, %s178
      %p182 = scmp.eq.s32.totalorder %s13, 0
      %p183 = por %p181, %p182
      %p184 = scmp.ne.s32.totalorder %s176, %s178
      %p185 = scmp.eq.s32.totalorder %s18, 3
      %p186 = por %p184, %p185
      %p187 = scmp.ne.s32.totalorder %s178, %s179
      %p188 = scmp.eq.s32.totalorder %s18, 0
      %p189 = por %p187, %p188
      %p190 = scmp.ne.s32.totalorder %s178, %s179
      %p191 = scmp.eq.s32.totalorder %s19, 3
      %p192 = por %p190, %p191
      %p194 = scmp.ne.s32.totalorder %s179, %s193
      %p195 = scmp.eq.s32.totalorder %s19, 0
      %p196 = por %p194, %p195
      %s197 = ssub.s32 %s20, %s32
      %p198 = scmp.eq.s32.totalorder %s197, 0
      %s200 = sadd.s32 %s199, 1
      %s201 = scalar_select %p198, %s199, %s200
      %p204 = pneg %p198
      %p205 = scmp.eq.s32.totalorder %s13, 3
      %p206 = por %p204, %p205
      %p207 = scmp.ne.s32.totalorder %s199, %s202
      %p208 = scmp.eq.s32.totalorder %s13, 0
      %p209 = por %p207, %p208
      %p210 = scmp.ne.s32.totalorder %s199, %s202
      %p211 = scmp.eq.s32.totalorder %s18, 3
      %p212 = por %p210, %p211
      %p213 = scmp.ne.s32.totalorder %s202, %s203
      %p214 = scmp.eq.s32.totalorder %s18, 0
      %p215 = por %p213, %p214
      %p216 = scmp.ne.s32.totalorder %s202, %s203
      %p217 = scmp.eq.s32.totalorder %s19, 3
      %p218 = por %p216, %p217
      %p220 = scmp.ne.s32.totalorder %s203, %s219
      %p221 = scmp.eq.s32.totalorder %s19, 0
      %p222 = por %p220, %p221
      %p223 = scmp.le.s32.totalorder 1, %s13
      %p224 = scmp.lt.s32.totalorder %s13, 5
      %p225 = pnand %p223, %p224
      %p226 = pneg %p225
      // Predicated region
      $region9: #{sage_classifier_forward.1} parent=5 // pred_check
        _
      $region10: #{sage_classifier_forward.1} parent=5 // pred_check_branch
        %228 = sbr.rel (%p225) target = $region12
      $region11: #{sage_classifier_forward.1} parent=5 // pred_region
        %s229 = ssub.s32 %s13, 1
        // Predicated region
        $region13: #{sage_classifier_forward.1} parent=11 // pred_check
          %p230 = pneg %p126
        $region14: #{sage_classifier_forward.1} parent=11 // pred_check_branch
          %232 = sbr.rel (%p230) target = $region16
        $region15: #{sage_classifier_forward.1} parent=11 // pred_region
          _
        $region16: #{sage_classifier_forward.1} parent=11 // pred_fallthru
          _
        // Predicated region
        $region17: #{sage_classifier_forward.1} parent=11 // pred_check
          %p233 = pneg %p147
        $region18: #{sage_classifier_forward.1} parent=11 // pred_check_branch
          %235 = sbr.rel (%p233) target = $region20
        $region19: #{sage_classifier_forward.1} parent=11 // pred_region
          _
        $region20: #{sage_classifier_forward.1} parent=11 // pred_fallthru
          _
        // Predicated region
        $region21: #{sage_classifier_forward.1} parent=11 // pred_check
          %p236 = pneg %p168
        $region22: #{sage_classifier_forward.1} parent=11 // pred_check_branch
          %238 = sbr.rel (%p236) target = $region24
        $region23: #{sage_classifier_forward.1} parent=11 // pred_region
          _
        $region24: #{sage_classifier_forward.1} parent=11 // pred_fallthru
          _
        // Predicated region
        $region25: #{sage_classifier_forward.1} parent=11 // pred_check
          %p239 = pneg %p189
        $region26: #{sage_classifier_forward.1} parent=11 // pred_check_branch
          %241 = sbr.rel (%p239) target = $region28
        $region27: #{sage_classifier_forward.1} parent=11 // pred_region
          _
        $region28: #{sage_classifier_forward.1} parent=11 // pred_fallthru
          _
      $region12: #{sage_classifier_forward.1} parent=5 // pred_fallthru
        _
      %p242 = scmp.lt.s32.totalorder %s13, 4
      // Predicated region
      $region29: #{sage_classifier_forward.1} parent=5 // pred_check
        %p243 = pneg %p242
      $region30: #{sage_classifier_forward.1} parent=5 // pred_check_branch
        %245 = sbr.rel (%p243) target = $region32
      $region31: #{sage_classifier_forward.1} parent=5 // pred_region
        // Predicated region
        $region33: #{sage_classifier_forward.1} parent=31 // pred_check
          %p246 = pneg %p47
        $region34: #{sage_classifier_forward.1} parent=31 // pred_check_branch
          %248 = sbr.rel (%p246) target = $region36
        $region35: #{sage_classifier_forward.1} parent=31 // pred_region
          %s249 = sand.u32 %s37, 1
          %s250 = sand.u32 %s37, 1
          %s251 = smul.addr %s250, 64
          %s252 = scalar_lea.vmem [#allocation4], %s251
          %s253 = smul.u32 16, %s20
          %s254 = smul.addr %s253, 2
          %s255 = sadd.s32 %s21, %s254
          %s256 = smul.addr %s255, 4
          %s257 = scalar_lea.vmem %s0, %s256
          // Predicated region
          $region37: #{sage_classifier_forward.1} parent=35 // pred_check
            _
          $region38: #{sage_classifier_forward.1} parent=35 // pred_check_branch
            %259 = sbr.rel (0) target = $region40
          $region39: #{sage_classifier_forward.1} parent=35 // pred_region
            // Predicated region
            $region41: #{sage_classifier_forward.1} parent=39 // pred_check
              _
            $region42: #{sage_classifier_forward.1} parent=39 // pred_check_branch
              %261 = sbr.rel target = $region44
            $region43: #{sage_classifier_forward.1} parent=39 // pred_region
              // Predicated region
              $region56: #{sage_classifier_forward.1} parent=43 // pred_check
                _
              $region57: #{sage_classifier_forward.1} parent=43 // pred_check_branch
                %307 = sbr.rel (0) target = $region59
              $region58: #{sage_classifier_forward.1} parent=43 // pred_region
                loop: start=0, step=1, limit=1
                $region60: #{sage_classifier_forward.1} parent=58 // loop_pre_header
                  _
                $region61: #{sage_classifier_forward.1} parent=58 // loop_header
                  %s309 = sphi 0, %s313
                  %p310 = scmp.ge.s32.totalorder %s309, 1
                  %s314 = sphi %s257, %s257
                  %s315 = sphi %s252, %s252
                $region62: #{sage_classifier_forward.1} parent=58 // loop_header_branch
                  %312 = sbr.rel (%p310) target = $region66
                $region63: #{sage_classifier_forward.1} parent=58 // loop_body
                  _
                $region64: #{sage_classifier_forward.1} parent=58 // loop_footer
                  %s313 = sadd.s32 1, %s309
                $region65: #{sage_classifier_forward.1} parent=58 // loop_footer_branch
                  %308 = sbr.rel target = $region61
                $region66: #{sage_classifier_forward.1} parent=58 // loop_exit
                  _
                %s317 = ssub.s32 16, 1
                loop: start=0, step=1, limit=1
                $region67: #{sage_classifier_forward.1} parent=58 // loop_pre_header
                  _
                $region68: #{sage_classifier_forward.1} parent=58 // loop_header
                  %s319 = sphi 0, %s323
                  %p320 = scmp.ge.s32.totalorder %s319, 1
                  %s324 = sphi %s257, %s257
                  %s325 = sphi %s252, %s252
                $region69: #{sage_classifier_forward.1} parent=58 // loop_header_branch
                  %322 = sbr.rel (%p320) target = $region73
                $region70: #{sage_classifier_forward.1} parent=58 // loop_body
                  %v326 = vld [vmem:[%s324] sm:%s317]
                  %327 = vst [vmem:[%s325] sm:%s317] %v326
                  %v328 = vld [vmem:[%s324 + $0x8] sm:%s317]
                  %329 = vst [vmem:[%s325 + $0x4] sm:%s317] %v328
                  %v330 = vld [vmem:[%s324 + $0x10] sm:%s317]
                  %331 = vst [vmem:[%s325 + $0x8] sm:%s317] %v330
                  %v332 = vld [vmem:[%s324 + $0x18] sm:%s317]
                  %333 = vst [vmem:[%s325 + $0xc] sm:%s317] %v332
                  %v334 = vld [vmem:[%s324 + $0x20] sm:%s317]
                  %335 = vst [vmem:[%s325 + $0x10] sm:%s317] %v334
                  %v336 = vld [vmem:[%s324 + $0x28] sm:%s317]
                  %337 = vst [vmem:[%s325 + $0x14] sm:%s317] %v336
                  %v338 = vld [vmem:[%s324 + $0x30] sm:%s317]
                  %339 = vst [vmem:[%s325 + $0x18] sm:%s317] %v338
                  %v340 = vld [vmem:[%s324 + $0x38] sm:%s317]
                  %341 = vst [vmem:[%s325 + $0x1c] sm:%s317] %v340
                  %v342 = vld [vmem:[%s324 + $0x40] sm:%s317]
                  %343 = vst [vmem:[%s325 + $0x20] sm:%s317] %v342
                  %v344 = vld [vmem:[%s324 + $0x48] sm:%s317]
                  %345 = vst [vmem:[%s325 + $0x24] sm:%s317] %v344
                  %v346 = vld [vmem:[%s324 + $0x50] sm:%s317]
                  %347 = vst [vmem:[%s325 + $0x28] sm:%s317] %v346
                  %v348 = vld [vmem:[%s324 + $0x58] sm:%s317]
                  %349 = vst [vmem:[%s325 + $0x2c] sm:%s317] %v348
                  %v350 = vld [vmem:[%s324 + $0x60] sm:%s317]
                  %351 = vst [vmem:[%s325 + $0x30] sm:%s317] %v350
                  %v352 = vld [vmem:[%s324 + $0x68] sm:%s317]
                  %353 = vst [vmem:[%s325 + $0x34] sm:%s317] %v352
                  %v354 = vld [vmem:[%s324 + $0x70] sm:%s317]
                  %355 = vst [vmem:[%s325 + $0x38] sm:%s317] %v354
                  %v356 = vld [vmem:[%s324 + $0x78] sm:%s317]
                  %357 = vst [vmem:[%s325 + $0x3c] sm:%s317] %v356
                $region71: #{sage_classifier_forward.1} parent=58 // loop_footer
                  %s323 = sadd.s32 1, %s319
                $region72: #{sage_classifier_forward.1} parent=58 // loop_footer_branch
                  %318 = sbr.rel target = $region68
                $region73: #{sage_classifier_forward.1} parent=58 // loop_exit
                  _
              $region59: #{sage_classifier_forward.1} parent=43 // pred_fallthru
                _
            $region44: #{sage_classifier_forward.1} parent=39 // pred_fallthru
              _
            // Predicated region
            $region45: #{sage_classifier_forward.1} parent=39 // pred_check
              _
            $region46: #{sage_classifier_forward.1} parent=39 // pred_check_branch
              %263 = sbr.rel (0) target = $region48
            $region47: #{sage_classifier_forward.1} parent=39 // pred_region
              %s265 = ssub.s32 16, 1
              loop: start=0, step=1, limit=1
              $region49: #{sage_classifier_forward.1} parent=47 // loop_pre_header
                _
              $region50: #{sage_classifier_forward.1} parent=47 // loop_header
                %s267 = sphi 0, %s271
                %p268 = scmp.ge.s32.totalorder %s267, 1
                %s272 = sphi %s257, %s257
                %s273 = sphi %s252, %s252
              $region51: #{sage_classifier_forward.1} parent=47 // loop_header_branch
                %270 = sbr.rel (%p268) target = $region55
              $region52: #{sage_classifier_forward.1} parent=47 // loop_body
                %v274 = vld [vmem:[%s272] sm:%s265]
                %275 = vst [vmem:[%s273] sm:%s265] %v274
                %v276 = vld [vmem:[%s272 + $0x8] sm:%s265]
                %277 = vst [vmem:[%s273 + $0x4] sm:%s265] %v276
                %v278 = vld [vmem:[%s272 + $0x10] sm:%s265]
                %279 = vst [vmem:[%s273 + $0x8] sm:%s265] %v278
                %v280 = vld [vmem:[%s272 + $0x18] sm:%s265]
                %281 = vst [vmem:[%s273 + $0xc] sm:%s265] %v280
                %v282 = vld [vmem:[%s272 + $0x20] sm:%s265]
                %283 = vst [vmem:[%s273 + $0x10] sm:%s265] %v282
                %v284 = vld [vmem:[%s272 + $0x28] sm:%s265]
                %285 = vst [vmem:[%s273 + $0x14] sm:%s265] %v284
                %v286 = vld [vmem:[%s272 + $0x30] sm:%s265]
                %287 = vst [vmem:[%s273 + $0x18] sm:%s265] %v286
                %v288 = vld [vmem:[%s272 + $0x38] sm:%s265]
                %289 = vst [vmem:[%s273 + $0x1c] sm:%s265] %v288
                %v290 = vld [vmem:[%s272 + $0x40] sm:%s265]
                %291 = vst [vmem:[%s273 + $0x20] sm:%s265] %v290
                %v292 = vld [vmem:[%s272 + $0x48] sm:%s265]
                %293 = vst [vmem:[%s273 + $0x24] sm:%s265] %v292
                %v294 = vld [vmem:[%s272 + $0x50] sm:%s265]
                %295 = vst [vmem:[%s273 + $0x28] sm:%s265] %v294
                %v296 = vld [vmem:[%s272 + $0x58] sm:%s265]
                %297 = vst [vmem:[%s273 + $0x2c] sm:%s265] %v296
                %v298 = vld [vmem:[%s272 + $0x60] sm:%s265]
                %299 = vst [vmem:[%s273 + $0x30] sm:%s265] %v298
                %v300 = vld [vmem:[%s272 + $0x68] sm:%s265]
                %301 = vst [vmem:[%s273 + $0x34] sm:%s265] %v300
                %v302 = vld [vmem:[%s272 + $0x70] sm:%s265]
                %303 = vst [vmem:[%s273 + $0x38] sm:%s265] %v302
                %v304 = vld [vmem:[%s272 + $0x78] sm:%s265]
                %305 = vst [vmem:[%s273 + $0x3c] sm:%s265] %v304
              $region53: #{sage_classifier_forward.1} parent=47 // loop_footer
                %s271 = sadd.s32 1, %s267
              $region54: #{sage_classifier_forward.1} parent=47 // loop_footer_branch
                %266 = sbr.rel target = $region50
              $region55: #{sage_classifier_forward.1} parent=47 // loop_exit
                _
            $region48: #{sage_classifier_forward.1} parent=39 // pred_fallthru
              _
          $region40: #{sage_classifier_forward.1} parent=35 // pred_fallthru
            _
          %358 = vnop
        $region36: #{sage_classifier_forward.1} parent=31 // pred_fallthru
          _
        // Predicated region
        $region74: #{sage_classifier_forward.1} parent=31 // pred_check
          %p359 = pneg %p73
        $region75: #{sage_classifier_forward.1} parent=31 // pred_check_branch
          %361 = sbr.rel (%p359) target = $region77
        $region76: #{sage_classifier_forward.1} parent=31 // pred_region
          %s362 = smul.u32 16, %s21
          %p363 = scmp.lt.s32.totalorder %s362, 31
          %s364 = scalar_select %p363, %s362, 31
          %s365 = smul.addr %s364, 4
          %s366 = scalar_lea.vmem %s1, %s365
          %s367 = smul.u32 16, %s21
        $region77: #{sage_classifier_forward.1} parent=31 // pred_fallthru
          _
        // Predicated region
        $region78: #{sage_classifier_forward.1} parent=31 // pred_check
          %p368 = pneg %p99
        $region79: #{sage_classifier_forward.1} parent=31 // pred_check_branch
          %370 = sbr.rel (%p368) target = $region81
        $region80: #{sage_classifier_forward.1} parent=31 // pred_region
          %s371 = smul.u32 16, %s20
          %p372 = scmp.lt.s32.totalorder %s371, 31
          %s373 = scalar_select %p372, %s371, 31
          %s374 = smul.addr %s373, 4
          %s375 = scalar_lea.vmem %s2, %s374
          %s376 = smul.u32 16, %s20
        $region81: #{sage_classifier_forward.1} parent=31 // pred_fallthru
          _
      $region32: #{sage_classifier_forward.1} parent=5 // pred_fallthru
        _
      %p377 = scmp.le.s32.totalorder 1, %s13
      %p378 = scmp.lt.s32.totalorder %s13, 5
      %p379 = pnand %p377, %p378
      %p380 = pneg %p379
      // Predicated region
      $region82: #{sage_classifier_forward.1} parent=5 // pred_check
        _
      $region83: #{sage_classifier_forward.1} parent=5 // pred_check_branch
        %382 = sbr.rel (%p379) target = $region85
      $region84: #{sage_classifier_forward.1} parent=5 // pred_region
        %s383 = ssub.s32 %s13, 1
        %s384 = sand.u32 %s40, 1
        %s385 = sand.u32 %s40, 1
        %s386 = smul.addr %s385, 64
        %s387 = scalar_lea.vmem [#allocation4], %s386
        // Predicated region
        $region86: #{sage_classifier_forward.1} parent=84 // pred_check
          %p388 = pneg %p53
        $region87: #{sage_classifier_forward.1} parent=84 // pred_check_branch
          %390 = sbr.rel (%p388) target = $region89
        $region88: #{sage_classifier_forward.1} parent=84 // pred_region
          _
        $region89: #{sage_classifier_forward.1} parent=84 // pred_fallthru
          _
        %s391 = sand.u32 %s40, 1
        %s392 = sand.u32 %s40, 1
        %s393 = smul.addr %s392, 64
        %s394 = scalar_lea.vmem [#allocation4], %s393
        %p395 = pneg %p53
        %p396 = pneg %p50
        %s397 = smul.u32 16, %s23
        %p398 = scmp.lt.s32.totalorder %s397, 31
        %s399 = scalar_select %p398, %s397, 31
        %s400 = smul.addr %s399, 4
        %s401 = scalar_lea.vmem %s1, %s400
        %p402 = pneg %p79
        %p403 = pneg %p76
        %s404 = smul.u32 16, %s22
        %p405 = scmp.lt.s32.totalorder %s404, 31
        %s406 = scalar_select %p405, %s404, 31
        %s407 = smul.addr %s406, 4
        %s408 = scalar_lea.vmem %s2, %s407
        %p409 = pneg %p105
        %p410 = pneg %p102
        %p411 = pneg %p126
        %p412 = pneg %p123
        %p413 = pneg %p147
        %p414 = pneg %p144
        %p415 = pneg %p168
        %p416 = pneg %p165
        %p417 = pneg %p189
        %p418 = pneg %p186
        %p419 = pneg %p215
        %p420 = pneg %p212
        %s421 = smul.u32 16, %s22
        %p422 = scmp.lt.s32.totalorder %s421, 31
        %s423 = scalar_select %p422, %s421, 31
        %s424 = smul.addr %s423, 8
        %s425 = scalar_lea.vmem %s7, %s424
        %s426 = smul.u32 16, %s22
        %s427 = smul.u32 16, %s23
        %p428 = scmp.lt.s32.totalorder %s427, 31
        %s429 = scalar_select %p428, %s427, 31
        %s430 = smul.addr %s429, 4
        %s431 = scalar_lea.vmem %s1, %s430
        %s432 = smul.u32 16, %s23
        %s433 = smul.u32 16, %s22
        %p434 = scmp.lt.s32.totalorder %s433, 31
        %s435 = scalar_select %p434, %s433, 31
        %s436 = smul.addr %s435, 4
        %s437 = scalar_lea.vmem %s2, %s436
        %s438 = smul.u32 16, %s22
        %s439 = smul.u32 16, %s22
        %p440 = scmp.lt.s32.totalorder %s439, 31
        %s441 = scalar_select %p440, %s439, 31
        %s442 = smul.addr %s441, 8
        %s443 = scalar_lea.vmem %s7, %s442
        %s444 = smul.u32 16, %s22
        %p445 = scmp.eq.s32.totalorder %s23, 0
        // Predicated region
        $region90: #{sage_classifier_forward.1} parent=84 // pred_check
          %p446 = pneg %p445
        $region91: #{sage_classifier_forward.1} parent=84 // pred_check_branch
          %448 = sbr.rel (%p446) target = $region93
        $region92: #{sage_classifier_forward.1} parent=84 // pred_region
          %449 = vst [vmem:[#allocation2] sm:$0xff] 0.0
          %450 = vst [vmem:[#allocation2 + $0x8] sm:$0xff] 0.0
          %451 = vst [vmem:[#allocation2 + $0x10] sm:$0xff] 0.0
          %452 = vst [vmem:[#allocation2 + $0x18] sm:$0xff] 0.0
          %453 = vst [vmem:[#allocation2 + $0x20] sm:$0xff] 0.0
          %454 = vst [vmem:[#allocation2 + $0x28] sm:$0xff] 0.0
          %455 = vst [vmem:[#allocation2 + $0x30] sm:$0xff] 0.0
          %456 = vst [vmem:[#allocation2 + $0x38] sm:$0xff] 0.0
          %457 = vst [vmem:[#allocation2 + $0x40] sm:$0xff] 0.0
          %458 = vst [vmem:[#allocation2 + $0x48] sm:$0xff] 0.0
          %459 = vst [vmem:[#allocation2 + $0x50] sm:$0xff] 0.0
          %460 = vst [vmem:[#allocation2 + $0x58] sm:$0xff] 0.0
          %461 = vst [vmem:[#allocation2 + $0x60] sm:$0xff] 0.0
          %462 = vst [vmem:[#allocation2 + $0x68] sm:$0xff] 0.0
          %463 = vst [vmem:[#allocation2 + $0x70] sm:$0xff] 0.0
          %464 = vst [vmem:[#allocation2 + $0x78] sm:$0xff] 0.0
          %vm465 = vcmask 7168
          %466 = vst.msk [vmem:[#allocation3] sm:$0xff] %vm465, 0.0
          %467 = vst.msk [vmem:[#allocation3 + $0x8] sm:$0xff] %vm465, 0.0
          %468 = vst.msk [vmem:[#allocation3 + $0x10] sm:$0xff] %vm465, 0.0
          %469 = vst.msk [vmem:[#allocation3 + $0x18] sm:$0xff] %vm465, 0.0
          %470 = vst.msk [vmem:[#allocation3 + $0x20] sm:$0xff] %vm465, 0.0
          %471 = vst.msk [vmem:[#allocation3 + $0x28] sm:$0xff] %vm465, 0.0
          %472 = vst.msk [vmem:[#allocation3 + $0x30] sm:$0xff] %vm465, 0.0
          %473 = vst.msk [vmem:[#allocation3 + $0x38] sm:$0xff] %vm465, 0.0
          %474 = vst.msk [vmem:[#allocation3 + $0x40] sm:$0xff] %vm465, 0.0
          %475 = vst.msk [vmem:[#allocation3 + $0x48] sm:$0xff] %vm465, 0.0
          %476 = vst.msk [vmem:[#allocation3 + $0x50] sm:$0xff] %vm465, 0.0
          %477 = vst.msk [vmem:[#allocation3 + $0x58] sm:$0xff] %vm465, 0.0
          %478 = vst.msk [vmem:[#allocation3 + $0x60] sm:$0xff] %vm465, 0.0
          %479 = vst.msk [vmem:[#allocation3 + $0x68] sm:$0xff] %vm465, 0.0
          %480 = vst.msk [vmem:[#allocation3 + $0x70] sm:$0xff] %vm465, 0.0
          %481 = vst.msk [vmem:[#allocation3 + $0x78] sm:$0xff] %vm465, 0.0
        $region93: #{sage_classifier_forward.1} parent=84 // pred_fallthru
          _
        %v482 = vld [vmem:[%s387] sm:$0xf]
        %v483 = vld [vmem:[%s387 + $0x4] sm:$0xf]
        %v484 = vld [vmem:[%s387 + $0x8] sm:$0xf]
        %v485 = vld [vmem:[%s387 + $0xc] sm:$0xf]
        %v486 = vld [vmem:[%s387 + $0x10] sm:$0xf]
        %v487 = vld [vmem:[%s387 + $0x14] sm:$0xf]
        %v488 = vld [vmem:[%s387 + $0x18] sm:$0xf]
        %v489 = vld [vmem:[%s387 + $0x1c] sm:$0xf]
        %v490 = vld [vmem:[%s387 + $0x20] sm:$0xf]
        %v491 = vld [vmem:[%s387 + $0x24] sm:$0xf]
        %v492 = vld [vmem:[%s387 + $0x28] sm:$0xf]
        %v493 = vld [vmem:[%s387 + $0x2c] sm:$0xf]
        %v494 = vld [vmem:[%s387 + $0x30] sm:$0xf]
        %v495 = vld [vmem:[%s387 + $0x34] sm:$0xf]
        %v496 = vld [vmem:[%s387 + $0x38] sm:$0xf]
        %v497 = vld [vmem:[%s387 + $0x3c] sm:$0xf]
        %v498 = vld [vmem:[#allocation2] sm:$0xff]
        %v499 = vld [vmem:[#allocation2 + $0x8] sm:$0xff]
        %v500 = vld [vmem:[#allocation2 + $0x10] sm:$0xff]
        %v501 = vld [vmem:[#allocation2 + $0x18] sm:$0xff]
        %v502 = vld [vmem:[#allocation2 + $0x20] sm:$0xff]
        %v503 = vld [vmem:[#allocation2 + $0x28] sm:$0xff]
        %v504 = vld [vmem:[#allocation2 + $0x30] sm:$0xff]
        %v505 = vld [vmem:[#allocation2 + $0x38] sm:$0xff]
        %v506 = vld [vmem:[#allocation2 + $0x40] sm:$0xff]
        %v507 = vld [vmem:[#allocation2 + $0x48] sm:$0xff]
        %v508 = vld [vmem:[#allocation2 + $0x50] sm:$0xff]
        %v509 = vld [vmem:[#allocation2 + $0x58] sm:$0xff]
        %v510 = vld [vmem:[#allocation2 + $0x60] sm:$0xff]
        %v511 = vld [vmem:[#allocation2 + $0x68] sm:$0xff]
        %v512 = vld [vmem:[#allocation2 + $0x70] sm:$0xff]
        %v513 = vld [vmem:[#allocation2 + $0x78] sm:$0xff]
        %v514 = vld [vmem:[%s431] sm:$0xf]
        %v515 = vld [vmem:[%s431 + $0x4] sm:$0xf]
        %v516 = vld [vmem:[%s431 + $0x8] sm:$0xf]
        %v517 = vld [vmem:[%s431 + $0xc] sm:$0xf]
        %v518 = vld [vmem:[%s431 + $0x10] sm:$0xf]
        %v519 = vld [vmem:[%s431 + $0x14] sm:$0xf]
        %v520 = vld [vmem:[%s431 + $0x18] sm:$0xf]
        %v521 = vld [vmem:[%s431 + $0x1c] sm:$0xf]
        %v522 = vld [vmem:[%s431 + $0x20] sm:$0xf]
        %v523 = vld [vmem:[%s431 + $0x24] sm:$0xf]
        %v524 = vld [vmem:[%s431 + $0x28] sm:$0xf]
        %v525 = vld [vmem:[%s431 + $0x2c] sm:$0xf]
        %v526 = vld [vmem:[%s431 + $0x30] sm:$0xf]
        %v527 = vld [vmem:[%s431 + $0x34] sm:$0xf]
        %v528 = vld [vmem:[%s431 + $0x38] sm:$0xf]
        %v529 = vld [vmem:[%s431 + $0x3c] sm:$0xf]
        %v546 = vunpack.c.l.b16 %v482
        %v547 = vunpack.c.l.b16 %v483
        %v548 = vunpack.c.l.b16 %v484
        %v549 = vunpack.c.l.b16 %v485
        %v550 = vunpack.c.l.b16 %v486
        %v551 = vunpack.c.l.b16 %v487
        %v552 = vunpack.c.l.b16 %v488
        %v553 = vunpack.c.l.b16 %v489
        %v554 = vunpack.c.l.b16 %v490
        %v555 = vunpack.c.l.b16 %v491
        %v556 = vunpack.c.l.b16 %v492
        %v557 = vunpack.c.l.b16 %v493
        %v558 = vunpack.c.l.b16 %v494
        %v559 = vunpack.c.l.b16 %v495
        %v560 = vunpack.c.l.b16 %v496
        %v561 = vunpack.c.l.b16 %v497
        %v562 = vpack.c.b16 %v547, %v546
        %v563 = vpack.c.b16 %v549, %v548
        %v564 = vpack.c.b16 %v551, %v550
        %v565 = vpack.c.b16 %v553, %v552
        %v566 = vpack.c.b16 %v555, %v554
        %v567 = vpack.c.b16 %v557, %v556
        %v568 = vpack.c.b16 %v559, %v558
        %v569 = vpack.c.b16 %v561, %v560
        %v594 = vunpack.c.l.b16 %v514
        %v595 = vunpack.c.l.b16 %v515
        %v596 = vunpack.c.l.b16 %v516
        %v597 = vunpack.c.l.b16 %v517
        %v598 = vunpack.c.l.b16 %v518
        %v599 = vunpack.c.l.b16 %v519
        %v600 = vunpack.c.l.b16 %v520
        %v601 = vunpack.c.l.b16 %v521
        %v602 = vunpack.c.l.b16 %v522
        %v603 = vunpack.c.l.b16 %v523
        %v604 = vunpack.c.l.b16 %v524
        %v605 = vunpack.c.l.b16 %v525
        %v606 = vunpack.c.l.b16 %v526
        %v607 = vunpack.c.l.b16 %v527
        %v608 = vunpack.c.l.b16 %v528
        %v609 = vunpack.c.l.b16 %v529
        %v610 = vpack.c.b16 %v595, %v594
        %v611 = vpack.c.b16 %v597, %v596
        %v612 = vpack.c.b16 %v599, %v598
        %v613 = vpack.c.b16 %v601, %v600
        %v614 = vpack.c.b16 %v603, %v602
        %v615 = vpack.c.b16 %v605, %v604
        %v616 = vpack.c.b16 %v607, %v606
        %v617 = vpack.c.b16 %v609, %v608
        %626 = vmatpush.bf16.msra.mxu0 %v617
        %627 = vmatpush.bf16.msra.mxu0 %v616
        %628 = vmatpush.bf16.msra.mxu0 %v615
        %629 = vmatpush.bf16.msra.mxu0 %v614
        %630 = vmatpush.bf16.msra.mxu0 %v613
        %631 = vmatpush.bf16.msra.mxu0 %v612
        %632 = vmatpush.bf16.msra.mxu0 %v611
        %633 = vmatpush.bf16.msra.mxu0 %v610
        %634 = vmatmul.bf16.gmra.mxu0 %v562
        %v635 = vpop.f32.mrf.mxu0
        %v636 = vadd.f32 0.0, %v635
        %v637 = vpop.f32.mrf.mxu0
        %v638 = vadd.f32 0.0, %v637
        %639 = vmatmul.bf16.gmra.mxu0 %v563
        %v640 = vpop.f32.mrf.mxu0
        %v641 = vadd.f32 0.0, %v640
        %v642 = vpop.f32.mrf.mxu0
        %v643 = vadd.f32 0.0, %v642
        %644 = vmatmul.bf16.gmra.mxu0 %v564
        %v645 = vpop.f32.mrf.mxu0
        %v646 = vadd.f32 0.0, %v645
        %v647 = vpop.f32.mrf.mxu0
        %v648 = vadd.f32 0.0, %v647
        %649 = vmatmul.bf16.gmra.mxu0 %v565
        %v650 = vpop.f32.mrf.mxu0
        %v651 = vadd.f32 0.0, %v650
        %v652 = vpop.f32.mrf.mxu0
        %v653 = vadd.f32 0.0, %v652
        %654 = vmatmul.bf16.gmra.mxu0 %v566
        %v655 = vpop.f32.mrf.mxu0
        %v656 = vadd.f32 0.0, %v655
        %v657 = vpop.f32.mrf.mxu0
        %v658 = vadd.f32 0.0, %v657
        %659 = vmatmul.bf16.gmra.mxu0 %v567
        %v660 = vpop.f32.mrf.mxu0
        %v661 = vadd.f32 0.0, %v660
        %v662 = vpop.f32.mrf.mxu0
        %v663 = vadd.f32 0.0, %v662
        %664 = vmatmul.bf16.gmra.mxu0 %v568
        %v665 = vpop.f32.mrf.mxu0
        %v666 = vadd.f32 0.0, %v665
        %v667 = vpop.f32.mrf.mxu0
        %v668 = vadd.f32 0.0, %v667
        %669 = vmatmul.bf16.gmra.mxu0 %v569
        %v670 = vpop.f32.mrf.mxu0
        %v671 = vadd.f32 0.0, %v670
        %v672 = vpop.f32.mrf.mxu0
        %v673 = vadd.f32 0.0, %v672
        %674 = vdwg.mxu0
        %v675 = vadd.f32 %v498, %v636
        %v676 = vadd.f32 %v499, %v638
        %v677 = vadd.f32 %v500, %v641
        %v678 = vadd.f32 %v501, %v643
        %v679 = vadd.f32 %v502, %v646
        %v680 = vadd.f32 %v503, %v648
        %v681 = vadd.f32 %v504, %v651
        %v682 = vadd.f32 %v505, %v653
        %v683 = vadd.f32 %v506, %v656
        %v684 = vadd.f32 %v507, %v658
        %v685 = vadd.f32 %v508, %v661
        %v686 = vadd.f32 %v509, %v663
        %v687 = vadd.f32 %v510, %v666
        %v688 = vadd.f32 %v511, %v668
        %v689 = vadd.f32 %v512, %v671
        %v690 = vadd.f32 %v513, %v673
        %691 = vst [vmem:[#allocation2] sm:$0xff] %v675
        %692 = vst [vmem:[#allocation2 + $0x8] sm:$0xff] %v676
        %693 = vst [vmem:[#allocation2 + $0x10] sm:$0xff] %v677
        %694 = vst [vmem:[#allocation2 + $0x18] sm:$0xff] %v678
        %695 = vst [vmem:[#allocation2 + $0x20] sm:$0xff] %v679
        %696 = vst [vmem:[#allocation2 + $0x28] sm:$0xff] %v680
        %697 = vst [vmem:[#allocation2 + $0x30] sm:$0xff] %v681
        %698 = vst [vmem:[#allocation2 + $0x38] sm:$0xff] %v682
        %699 = vst [vmem:[#allocation2 + $0x40] sm:$0xff] %v683
        %700 = vst [vmem:[#allocation2 + $0x48] sm:$0xff] %v684
        %701 = vst [vmem:[#allocation2 + $0x50] sm:$0xff] %v685
        %702 = vst [vmem:[#allocation2 + $0x58] sm:$0xff] %v686
        %703 = vst [vmem:[#allocation2 + $0x60] sm:$0xff] %v687
        %704 = vst [vmem:[#allocation2 + $0x68] sm:$0xff] %v688
        %705 = vst [vmem:[#allocation2 + $0x70] sm:$0xff] %v689
        %706 = vst [vmem:[#allocation2 + $0x78] sm:$0xff] %v690
        %v707 = vld [vmem:[#allocation3] sm:$0xff]
        %v708 = vld [vmem:[#allocation3 + $0x8] sm:$0xff]
        %v709 = vld [vmem:[#allocation3 + $0x10] sm:$0xff]
        %v710 = vld [vmem:[#allocation3 + $0x18] sm:$0xff]
        %v711 = vld [vmem:[#allocation3 + $0x20] sm:$0xff]
        %v712 = vld [vmem:[#allocation3 + $0x28] sm:$0xff]
        %v713 = vld [vmem:[#allocation3 + $0x30] sm:$0xff]
        %v714 = vld [vmem:[#allocation3 + $0x38] sm:$0xff]
        %v715 = vld [vmem:[#allocation3 + $0x40] sm:$0xff]
        %v716 = vld [vmem:[#allocation3 + $0x48] sm:$0xff]
        %v717 = vld [vmem:[#allocation3 + $0x50] sm:$0xff]
        %v718 = vld [vmem:[#allocation3 + $0x58] sm:$0xff]
        %v719 = vld [vmem:[#allocation3 + $0x60] sm:$0xff]
        %v720 = vld [vmem:[#allocation3 + $0x68] sm:$0xff]
        %v721 = vld [vmem:[#allocation3 + $0x70] sm:$0xff]
        %v722 = vld [vmem:[#allocation3 + $0x78] sm:$0xff]
        %v723 = vunpack.c.l.bf16 %v482
        %v724 = vunpack.c.l.bf16 %v483
        %v725 = vunpack.c.l.bf16 %v484
        %v726 = vunpack.c.l.bf16 %v485
        %v727 = vunpack.c.l.bf16 %v486
        %v728 = vunpack.c.l.bf16 %v487
        %v729 = vunpack.c.l.bf16 %v488
        %v730 = vunpack.c.l.bf16 %v489
        %v731 = vunpack.c.l.bf16 %v490
        %v732 = vunpack.c.l.bf16 %v491
        %v733 = vunpack.c.l.bf16 %v492
        %v734 = vunpack.c.l.bf16 %v493
        %v735 = vunpack.c.l.bf16 %v494
        %v736 = vunpack.c.l.bf16 %v495
        %v737 = vunpack.c.l.bf16 %v496
        %v738 = vunpack.c.l.bf16 %v497
        %739 = vadd.xlane.f32.xlu0 %v723
        %v740 = vpop.xlane.xlu0 %739
        %741 = vadd.xlane.f32.xlu0 %v724
        %v742 = vpop.xlane.xlu0 %741
        %743 = vadd.xlane.f32.xlu0 %v725
        %v744 = vpop.xlane.xlu0 %743
        %745 = vadd.xlane.f32.xlu0 %v726
        %v746 = vpop.xlane.xlu0 %745
        %747 = vadd.xlane.f32.xlu0 %v727
        %v748 = vpop.xlane.xlu0 %747
        %749 = vadd.xlane.f32.xlu0 %v728
        %v750 = vpop.xlane.xlu0 %749
        %751 = vadd.xlane.f32.xlu0 %v729
        %v752 = vpop.xlane.xlu0 %751
        %753 = vadd.xlane.f32.xlu0 %v730
        %v754 = vpop.xlane.xlu0 %753
        %755 = vadd.xlane.f32.xlu0 %v731
        %v756 = vpop.xlane.xlu0 %755
        %757 = vadd.xlane.f32.xlu0 %v732
        %v758 = vpop.xlane.xlu0 %757
        %759 = vadd.xlane.f32.xlu0 %v733
        %v760 = vpop.xlane.xlu0 %759
        %761 = vadd.xlane.f32.xlu0 %v734
        %v762 = vpop.xlane.xlu0 %761
        %763 = vadd.xlane.f32.xlu0 %v735
        %v764 = vpop.xlane.xlu0 %763
        %765 = vadd.xlane.f32.xlu0 %v736
        %v766 = vpop.xlane.xlu0 %765
        %767 = vadd.xlane.f32.xlu0 %v737
        %v768 = vpop.xlane.xlu0 %767
        %769 = vadd.xlane.f32.xlu0 %v738
        %v770 = vpop.xlane.xlu0 %769
        %v771 = vadd.f32 %v707, %v740
        %v772 = vadd.f32 %v708, %v742
        %v773 = vadd.f32 %v709, %v744
        %v774 = vadd.f32 %v710, %v746
        %v775 = vadd.f32 %v711, %v748
        %v776 = vadd.f32 %v712, %v750
        %v777 = vadd.f32 %v713, %v752
        %v778 = vadd.f32 %v714, %v754
        %v779 = vadd.f32 %v715, %v756
        %v780 = vadd.f32 %v716, %v758
        %v781 = vadd.f32 %v717, %v760
        %v782 = vadd.f32 %v718, %v762
        %v783 = vadd.f32 %v719, %v764
        %v784 = vadd.f32 %v720, %v766
        %v785 = vadd.f32 %v721, %v768
        %v786 = vadd.f32 %v722, %v770
        %vm787 = vcmask 7168
        %788 = vst.msk [vmem:[#allocation3] sm:$0xff] %vm787, %v771
        %789 = vst.msk [vmem:[#allocation3 + $0x8] sm:$0xff] %vm787, %v772
        %790 = vst.msk [vmem:[#allocation3 + $0x10] sm:$0xff] %vm787, %v773
        %791 = vst.msk [vmem:[#allocation3 + $0x18] sm:$0xff] %vm787, %v774
        %792 = vst.msk [vmem:[#allocation3 + $0x20] sm:$0xff] %vm787, %v775
        %793 = vst.msk [vmem:[#allocation3 + $0x28] sm:$0xff] %vm787, %v776
        %794 = vst.msk [vmem:[#allocation3 + $0x30] sm:$0xff] %vm787, %v777
        %795 = vst.msk [vmem:[#allocation3 + $0x38] sm:$0xff] %vm787, %v778
        %796 = vst.msk [vmem:[#allocation3 + $0x40] sm:$0xff] %vm787, %v779
        %797 = vst.msk [vmem:[#allocation3 + $0x48] sm:$0xff] %vm787, %v780
        %798 = vst.msk [vmem:[#allocation3 + $0x50] sm:$0xff] %vm787, %v781
        %799 = vst.msk [vmem:[#allocation3 + $0x58] sm:$0xff] %vm787, %v782
        %800 = vst.msk [vmem:[#allocation3 + $0x60] sm:$0xff] %vm787, %v783
        %801 = vst.msk [vmem:[#allocation3 + $0x68] sm:$0xff] %vm787, %v784
        %802 = vst.msk [vmem:[#allocation3 + $0x70] sm:$0xff] %vm787, %v785
        %803 = vst.msk [vmem:[#allocation3 + $0x78] sm:$0xff] %vm787, %v786
        %p804 = scmp.eq.s32.totalorder %s23, 1
        // Predicated region
        $region94: #{sage_classifier_forward.1} parent=84 // pred_check
          %p805 = pneg %p804
        $region95: #{sage_classifier_forward.1} parent=84 // pred_check_branch
          %807 = sbr.rel (%p805) target = $region97
        $region96: #{sage_classifier_forward.1} parent=84 // pred_region
          %v808 = vld [vmem:[#allocation3] sm:$0xff]
          %v809 = vld [vmem:[#allocation3 + $0x8] sm:$0xff]
          %v810 = vld [vmem:[#allocation3 + $0x10] sm:$0xff]
          %v811 = vld [vmem:[#allocation3 + $0x18] sm:$0xff]
          %v812 = vld [vmem:[#allocation3 + $0x20] sm:$0xff]
          %v813 = vld [vmem:[#allocation3 + $0x28] sm:$0xff]
          %v814 = vld [vmem:[#allocation3 + $0x30] sm:$0xff]
          %v815 = vld [vmem:[#allocation3 + $0x38] sm:$0xff]
          %v816 = vld [vmem:[#allocation3 + $0x40] sm:$0xff]
          %v817 = vld [vmem:[#allocation3 + $0x48] sm:$0xff]
          %v818 = vld [vmem:[#allocation3 + $0x50] sm:$0xff]
          %v819 = vld [vmem:[#allocation3 + $0x58] sm:$0xff]
          %v820 = vld [vmem:[#allocation3 + $0x60] sm:$0xff]
          %v821 = vld [vmem:[#allocation3 + $0x68] sm:$0xff]
          %v822 = vld [vmem:[#allocation3 + $0x70] sm:$0xff]
          %v823 = vld [vmem:[#allocation3 + $0x78] sm:$0xff]
          %v824 = vadd.f32 %v808, 1.0
          %v825 = vadd.f32 %v809, 1.0
          %v826 = vadd.f32 %v810, 1.0
          %v827 = vadd.f32 %v811, 1.0
          %v828 = vadd.f32 %v812, 1.0
          %v829 = vadd.f32 %v813, 1.0
          %v830 = vadd.f32 %v814, 1.0
          %v831 = vadd.f32 %v815, 1.0
          %v832 = vadd.f32 %v816, 1.0
          %v833 = vadd.f32 %v817, 1.0
          %v834 = vadd.f32 %v818, 1.0
          %v835 = vadd.f32 %v819, 1.0
          %v836 = vadd.f32 %v820, 1.0
          %v837 = vadd.f32 %v821, 1.0
          %v838 = vadd.f32 %v822, 1.0
          %v839 = vadd.f32 %v823, 1.0
          %v840 = vrcp.pop %v824
          %v841 = vrcp.pop %v825
          %v842 = vrcp.pop %v826
          %v843 = vrcp.pop %v827
          %v844 = vrcp.pop %v828
          %v845 = vrcp.pop %v829
          %v846 = vrcp.pop %v830
          %v847 = vrcp.pop %v831
          %v848 = vrcp.pop %v832
          %v849 = vrcp.pop %v833
          %v850 = vrcp.pop %v834
          %v851 = vrcp.pop %v835
          %v852 = vrcp.pop %v836
          %v853 = vrcp.pop %v837
          %v854 = vrcp.pop %v838
          %v855 = vrcp.pop %v839
          %v856 = vld [vmem:[#allocation2] sm:$0xff]
          %v857 = vld [vmem:[#allocation2 + $0x8] sm:$0xff]
          %v858 = vld [vmem:[#allocation2 + $0x10] sm:$0xff]
          %v859 = vld [vmem:[#allocation2 + $0x18] sm:$0xff]
          %v860 = vld [vmem:[#allocation2 + $0x20] sm:$0xff]
          %v861 = vld [vmem:[#allocation2 + $0x28] sm:$0xff]
          %v862 = vld [vmem:[#allocation2 + $0x30] sm:$0xff]
          %v863 = vld [vmem:[#allocation2 + $0x38] sm:$0xff]
          %v864 = vld [vmem:[#allocation2 + $0x40] sm:$0xff]
          %v865 = vld [vmem:[#allocation2 + $0x48] sm:$0xff]
          %v866 = vld [vmem:[#allocation2 + $0x50] sm:$0xff]
          %v867 = vld [vmem:[#allocation2 + $0x58] sm:$0xff]
          %v868 = vld [vmem:[#allocation2 + $0x60] sm:$0xff]
          %v869 = vld [vmem:[#allocation2 + $0x68] sm:$0xff]
          %v870 = vld [vmem:[#allocation2 + $0x70] sm:$0xff]
          %v871 = vld [vmem:[#allocation2 + $0x78] sm:$0xff]
          %873 = vset.pattern.permute.xlu0 0
          %874 = vperm.xlu0 %873, %v840
          %v875 = vpop.permute.xlu0 %874
          %878 = vset.pattern.permute.xlu0 0
          %879 = vperm.xlu0 %878, %v841
          %v880 = vpop.permute.xlu0 %879
          %883 = vset.pattern.permute.xlu0 0
          %884 = vperm.xlu0 %883, %v842
          %v885 = vpop.permute.xlu0 %884
          %888 = vset.pattern.permute.xlu0 0
          %889 = vperm.xlu0 %888, %v843
          %v890 = vpop.permute.xlu0 %889
          %893 = vset.pattern.permute.xlu0 0
          %894 = vperm.xlu0 %893, %v844
          %v895 = vpop.permute.xlu0 %894
          %898 = vset.pattern.permute.xlu0 0
          %899 = vperm.xlu0 %898, %v845
          %v900 = vpop.permute.xlu0 %899
          %903 = vset.pattern.permute.xlu0 0
          %904 = vperm.xlu0 %903, %v846
          %v905 = vpop.permute.xlu0 %904
          %908 = vset.pattern.permute.xlu0 0
          %909 = vperm.xlu0 %908, %v847
          %v910 = vpop.permute.xlu0 %909
          %913 = vset.pattern.permute.xlu0 0
          %914 = vperm.xlu0 %913, %v848
          %v915 = vpop.permute.xlu0 %914
          %918 = vset.pattern.permute.xlu0 0
          %919 = vperm.xlu0 %918, %v849
          %v920 = vpop.permute.xlu0 %919
          %923 = vset.pattern.permute.xlu0 0
          %924 = vperm.xlu0 %923, %v850
          %v925 = vpop.permute.xlu0 %924
          %928 = vset.pattern.permute.xlu0 0
          %929 = vperm.xlu0 %928, %v851
          %v930 = vpop.permute.xlu0 %929
          %933 = vset.pattern.permute.xlu0 0
          %934 = vperm.xlu0 %933, %v852
          %v935 = vpop.permute.xlu0 %934
          %938 = vset.pattern.permute.xlu0 0
          %939 = vperm.xlu0 %938, %v853
          %v940 = vpop.permute.xlu0 %939
          %943 = vset.pattern.permute.xlu0 0
          %944 = vperm.xlu0 %943, %v854
          %v945 = vpop.permute.xlu0 %944
          %948 = vset.pattern.permute.xlu0 0
          %949 = vperm.xlu0 %948, %v855
          %v950 = vpop.permute.xlu0 %949
          %v952 = vmul.f32 %v856, %v875
          %v953 = vmul.f32 %v857, %v880
          %v954 = vmul.f32 %v858, %v885
          %v955 = vmul.f32 %v859, %v890
          %v956 = vmul.f32 %v860, %v895
          %v957 = vmul.f32 %v861, %v900
          %v958 = vmul.f32 %v862, %v905
          %v959 = vmul.f32 %v863, %v910
          %v960 = vmul.f32 %v864, %v915
          %v961 = vmul.f32 %v865, %v920
          %v962 = vmul.f32 %v866, %v925
          %v963 = vmul.f32 %v867, %v930
          %v964 = vmul.f32 %v868, %v935
          %v965 = vmul.f32 %v869, %v940
          %v966 = vmul.f32 %v870, %v945
          %v967 = vmul.f32 %v871, %v950
          %v968 = vpack.c.bf16 %v953, %v952
          %v969 = vpack.c.bf16 %v955, %v954
          %v970 = vpack.c.bf16 %v957, %v956
          %v971 = vpack.c.bf16 %v959, %v958
          %v972 = vpack.c.bf16 %v961, %v960
          %v973 = vpack.c.bf16 %v963, %v962
          %v974 = vpack.c.bf16 %v965, %v964
          %v975 = vpack.c.bf16 %v967, %v966
          %v976 = vld [vmem:[%s437] sm:$0xf]
          %v977 = vld [vmem:[%s437 + $0x4] sm:$0xf]
          %v978 = vld [vmem:[%s437 + $0x8] sm:$0xf]
          %v979 = vld [vmem:[%s437 + $0xc] sm:$0xf]
          %v980 = vld [vmem:[%s437 + $0x10] sm:$0xf]
          %v981 = vld [vmem:[%s437 + $0x14] sm:$0xf]
          %v982 = vld [vmem:[%s437 + $0x18] sm:$0xf]
          %v983 = vld [vmem:[%s437 + $0x1c] sm:$0xf]
          %v984 = vld [vmem:[%s437 + $0x20] sm:$0xf]
          %v985 = vld [vmem:[%s437 + $0x24] sm:$0xf]
          %v986 = vld [vmem:[%s437 + $0x28] sm:$0xf]
          %v987 = vld [vmem:[%s437 + $0x2c] sm:$0xf]
          %v988 = vld [vmem:[%s437 + $0x30] sm:$0xf]
          %v989 = vld [vmem:[%s437 + $0x34] sm:$0xf]
          %v990 = vld [vmem:[%s437 + $0x38] sm:$0xf]
          %v991 = vld [vmem:[%s437 + $0x3c] sm:$0xf]
          %v992 = vld [vmem:[%s3] sm:$0xf]
          %v993 = vld [vmem:[%s3 + $0x4] sm:$0xf]
          %v994 = vld [vmem:[%s3 + $0x8] sm:$0xf]
          %v995 = vld [vmem:[%s3 + $0xc] sm:$0xf]
          %v996 = vld [vmem:[%s3 + $0x10] sm:$0xf]
          %v997 = vld [vmem:[%s3 + $0x14] sm:$0xf]
          %v998 = vld [vmem:[%s3 + $0x18] sm:$0xf]
          %v999 = vld [vmem:[%s3 + $0x1c] sm:$0xf]
          %v1000 = vld [vmem:[%s3 + $0x20] sm:$0xf]
          %v1001 = vld [vmem:[%s3 + $0x24] sm:$0xf]
          %v1002 = vld [vmem:[%s3 + $0x28] sm:$0xf]
          %v1003 = vld [vmem:[%s3 + $0x2c] sm:$0xf]
          %v1004 = vld [vmem:[%s3 + $0x30] sm:$0xf]
          %v1005 = vld [vmem:[%s3 + $0x34] sm:$0xf]
          %v1006 = vld [vmem:[%s3 + $0x38] sm:$0xf]
          %v1007 = vld [vmem:[%s3 + $0x3c] sm:$0xf]
          %v1008 = vld [vmem:[%s4] sm:$0xf]
          %v1009 = vld [vmem:[%s4 + $0x4] sm:$0xf]
          %v1010 = vld [vmem:[%s4 + $0x8] sm:$0xf]
          %v1011 = vld [vmem:[%s4 + $0xc] sm:$0xf]
          %v1012 = vld [vmem:[%s4 + $0x10] sm:$0xf]
          %v1013 = vld [vmem:[%s4 + $0x14] sm:$0xf]
          %v1014 = vld [vmem:[%s4 + $0x18] sm:$0xf]
          %v1015 = vld [vmem:[%s4 + $0x1c] sm:$0xf]
          %v1016 = vld [vmem:[%s4 + $0x20] sm:$0xf]
          %v1017 = vld [vmem:[%s4 + $0x24] sm:$0xf]
          %v1018 = vld [vmem:[%s4 + $0x28] sm:$0xf]
          %v1019 = vld [vmem:[%s4 + $0x2c] sm:$0xf]
          %v1020 = vld [vmem:[%s4 + $0x30] sm:$0xf]
          %v1021 = vld [vmem:[%s4 + $0x34] sm:$0xf]
          %v1022 = vld [vmem:[%s4 + $0x38] sm:$0xf]
          %v1023 = vld [vmem:[%s4 + $0x3c] sm:$0xf]
          %v1040 = vunpack.c.l.b16 %v1008
          %v1041 = vunpack.c.l.b16 %v1009
          %v1042 = vunpack.c.l.b16 %v1010
          %v1043 = vunpack.c.l.b16 %v1011
          %v1044 = vunpack.c.l.b16 %v1012
          %v1045 = vunpack.c.l.b16 %v1013
          %v1046 = vunpack.c.l.b16 %v1014
          %v1047 = vunpack.c.l.b16 %v1015
          %v1048 = vunpack.c.l.b16 %v1016
          %v1049 = vunpack.c.l.b16 %v1017
          %v1050 = vunpack.c.l.b16 %v1018
          %v1051 = vunpack.c.l.b16 %v1019
          %v1052 = vunpack.c.l.b16 %v1020
          %v1053 = vunpack.c.l.b16 %v1021
          %v1054 = vunpack.c.l.b16 %v1022
          %v1055 = vunpack.c.l.b16 %v1023
          %v1056 = vpack.c.b16 %v1041, %v1040
          %v1057 = vpack.c.b16 %v1043, %v1042
          %v1058 = vpack.c.b16 %v1045, %v1044
          %v1059 = vpack.c.b16 %v1047, %v1046
          %v1060 = vpack.c.b16 %v1049, %v1048
          %v1061 = vpack.c.b16 %v1051, %v1050
          %v1062 = vpack.c.b16 %v1053, %v1052
          %v1063 = vpack.c.b16 %v1055, %v1054
          %1072 = vmatpush.bf16.msra.mxu0 %v1063
          %1073 = vmatpush.bf16.msra.mxu0 %v1062
          %1074 = vmatpush.bf16.msra.mxu0 %v1061
          %1075 = vmatpush.bf16.msra.mxu0 %v1060
          %1076 = vmatpush.bf16.msra.mxu0 %v1059
          %1077 = vmatpush.bf16.msra.mxu0 %v1058
          %1078 = vmatpush.bf16.msra.mxu0 %v1057
          %1079 = vmatpush.bf16.msra.mxu0 %v1056
          %1080 = vmatmul.bf16.gmra.mxu0 %v968
          %v1081 = vpop.f32.mrf.mxu0
          %v1082 = vadd.f32 0.0, %v1081
          %v1083 = vpop.f32.mrf.mxu0
          %v1084 = vadd.f32 0.0, %v1083
          %1085 = vmatmul.bf16.gmra.mxu0 %v969
          %v1086 = vpop.f32.mrf.mxu0
          %v1087 = vadd.f32 0.0, %v1086
          %v1088 = vpop.f32.mrf.mxu0
          %v1089 = vadd.f32 0.0, %v1088
          %1090 = vmatmul.bf16.gmra.mxu0 %v970
          %v1091 = vpop.f32.mrf.mxu0
          %v1092 = vadd.f32 0.0, %v1091
          %v1093 = vpop.f32.mrf.mxu0
          %v1094 = vadd.f32 0.0, %v1093
          %1095 = vmatmul.bf16.gmra.mxu0 %v971
          %v1096 = vpop.f32.mrf.mxu0
          %v1097 = vadd.f32 0.0, %v1096
          %v1098 = vpop.f32.mrf.mxu0
          %v1099 = vadd.f32 0.0, %v1098
          %1100 = vmatmul.bf16.gmra.mxu0 %v972
          %v1101 = vpop.f32.mrf.mxu0
          %v1102 = vadd.f32 0.0, %v1101
          %v1103 = vpop.f32.mrf.mxu0
          %v1104 = vadd.f32 0.0, %v1103
          %1105 = vmatmul.bf16.gmra.mxu0 %v973
          %v1106 = vpop.f32.mrf.mxu0
          %v1107 = vadd.f32 0.0, %v1106
          %v1108 = vpop.f32.mrf.mxu0
          %v1109 = vadd.f32 0.0, %v1108
          %1110 = vmatmul.bf16.gmra.mxu0 %v974
          %v1111 = vpop.f32.mrf.mxu0
          %v1112 = vadd.f32 0.0, %v1111
          %v1113 = vpop.f32.mrf.mxu0
          %v1114 = vadd.f32 0.0, %v1113
          %1115 = vmatmul.bf16.gmra.mxu0 %v975
          %v1116 = vpop.f32.mrf.mxu0
          %v1117 = vadd.f32 0.0, %v1116
          %v1118 = vpop.f32.mrf.mxu0
          %v1119 = vadd.f32 0.0, %v1118
          %1120 = vdwg.mxu0
          %v1137 = vunpack.c.l.b16 %v976
          %v1138 = vunpack.c.l.b16 %v977
          %v1139 = vunpack.c.l.b16 %v978
          %v1140 = vunpack.c.l.b16 %v979
          %v1141 = vunpack.c.l.b16 %v980
          %v1142 = vunpack.c.l.b16 %v981
          %v1143 = vunpack.c.l.b16 %v982
          %v1144 = vunpack.c.l.b16 %v983
          %v1145 = vunpack.c.l.b16 %v984
          %v1146 = vunpack.c.l.b16 %v985
          %v1147 = vunpack.c.l.b16 %v986
          %v1148 = vunpack.c.l.b16 %v987
          %v1149 = vunpack.c.l.b16 %v988
          %v1150 = vunpack.c.l.b16 %v989
          %v1151 = vunpack.c.l.b16 %v990
          %v1152 = vunpack.c.l.b16 %v991
          %v1153 = vpack.c.b16 %v1138, %v1137
          %v1154 = vpack.c.b16 %v1140, %v1139
          %v1155 = vpack.c.b16 %v1142, %v1141
          %v1156 = vpack.c.b16 %v1144, %v1143
          %v1157 = vpack.c.b16 %v1146, %v1145
          %v1158 = vpack.c.b16 %v1148, %v1147
          %v1159 = vpack.c.b16 %v1150, %v1149
          %v1160 = vpack.c.b16 %v1152, %v1151
          %v1185 = vunpack.c.l.b16 %v992
          %v1186 = vunpack.c.l.b16 %v993
          %v1187 = vunpack.c.l.b16 %v994
          %v1188 = vunpack.c.l.b16 %v995
          %v1189 = vunpack.c.l.b16 %v996
          %v1190 = vunpack.c.l.b16 %v997
          %v1191 = vunpack.c.l.b16 %v998
          %v1192 = vunpack.c.l.b16 %v999
          %v1193 = vunpack.c.l.b16 %v1000
          %v1194 = vunpack.c.l.b16 %v1001
          %v1195 = vunpack.c.l.b16 %v1002
          %v1196 = vunpack.c.l.b16 %v1003
          %v1197 = vunpack.c.l.b16 %v1004
          %v1198 = vunpack.c.l.b16 %v1005
          %v1199 = vunpack.c.l.b16 %v1006
          %v1200 = vunpack.c.l.b16 %v1007
          %v1201 = vpack.c.b16 %v1186, %v1185
          %v1202 = vpack.c.b16 %v1188, %v1187
          %v1203 = vpack.c.b16 %v1190, %v1189
          %v1204 = vpack.c.b16 %v1192, %v1191
          %v1205 = vpack.c.b16 %v1194, %v1193
          %v1206 = vpack.c.b16 %v1196, %v1195
          %v1207 = vpack.c.b16 %v1198, %v1197
          %v1208 = vpack.c.b16 %v1200, %v1199
          %1217 = vmatpush.bf16.msra.mxu0 %v1208
          %1218 = vmatpush.bf16.msra.mxu0 %v1207
          %1219 = vmatpush.bf16.msra.mxu0 %v1206
          %1220 = vmatpush.bf16.msra.mxu0 %v1205
          %1221 = vmatpush.bf16.msra.mxu0 %v1204
          %1222 = vmatpush.bf16.msra.mxu0 %v1203
          %1223 = vmatpush.bf16.msra.mxu0 %v1202
          %1224 = vmatpush.bf16.msra.mxu0 %v1201
          %1225 = vmatmul.bf16.gmra.mxu0 %v1153
          %v1226 = vpop.f32.mrf.mxu0
          %v1227 = vadd.f32 %v1082, %v1226
          %v1228 = vpop.f32.mrf.mxu0
          %v1229 = vadd.f32 %v1084, %v1228
          %1230 = vmatmul.bf16.gmra.mxu0 %v1154
          %v1231 = vpop.f32.mrf.mxu0
          %v1232 = vadd.f32 %v1087, %v1231
          %v1233 = vpop.f32.mrf.mxu0
          %v1234 = vadd.f32 %v1089, %v1233
          %1235 = vmatmul.bf16.gmra.mxu0 %v1155
          %v1236 = vpop.f32.mrf.mxu0
          %v1237 = vadd.f32 %v1092, %v1236
          %v1238 = vpop.f32.mrf.mxu0
          %v1239 = vadd.f32 %v1094, %v1238
          %1240 = vmatmul.bf16.gmra.mxu0 %v1156
          %v1241 = vpop.f32.mrf.mxu0
          %v1242 = vadd.f32 %v1097, %v1241
          %v1243 = vpop.f32.mrf.mxu0
          %v1244 = vadd.f32 %v1099, %v1243
          %1245 = vmatmul.bf16.gmra.mxu0 %v1157
          %v1246 = vpop.f32.mrf.mxu0
          %v1247 = vadd.f32 %v1102, %v1246
          %v1248 = vpop.f32.mrf.mxu0
          %v1249 = vadd.f32 %v1104, %v1248
          %1250 = vmatmul.bf16.gmra.mxu0 %v1158
          %v1251 = vpop.f32.mrf.mxu0
          %v1252 = vadd.f32 %v1107, %v1251
          %v1253 = vpop.f32.mrf.mxu0
          %v1254 = vadd.f32 %v1109, %v1253
          %1255 = vmatmul.bf16.gmra.mxu0 %v1159
          %v1256 = vpop.f32.mrf.mxu0
          %v1257 = vadd.f32 %v1112, %v1256
          %v1258 = vpop.f32.mrf.mxu0
          %v1259 = vadd.f32 %v1114, %v1258
          %1260 = vmatmul.bf16.gmra.mxu0 %v1160
          %v1261 = vpop.f32.mrf.mxu0
          %v1262 = vadd.f32 %v1117, %v1261
          %v1263 = vpop.f32.mrf.mxu0
          %v1264 = vadd.f32 %v1119, %v1263
          %1265 = vdwg.mxu0
          %v1266 = vmax.f32 %v1227, 0.0
          %v1267 = vmax.f32 %v1229, 0.0
          %v1268 = vmax.f32 %v1232, 0.0
          %v1269 = vmax.f32 %v1234, 0.0
          %v1270 = vmax.f32 %v1237, 0.0
          %v1271 = vmax.f32 %v1239, 0.0
          %v1272 = vmax.f32 %v1242, 0.0
          %v1273 = vmax.f32 %v1244, 0.0
          %v1274 = vmax.f32 %v1247, 0.0
          %v1275 = vmax.f32 %v1249, 0.0
          %v1276 = vmax.f32 %v1252, 0.0
          %v1277 = vmax.f32 %v1254, 0.0
          %v1278 = vmax.f32 %v1257, 0.0
          %v1279 = vmax.f32 %v1259, 0.0
          %v1280 = vmax.f32 %v1262, 0.0
          %v1281 = vmax.f32 %v1264, 0.0
          %v1282 = vld [vmem:[%s5] sm:$0xff]
          %v1283 = vld [vmem:[%s5 + $0x8] sm:$0xff]
          %v1284 = vld [vmem:[%s5 + $0x10] sm:$0xff]
          %v1285 = vld [vmem:[%s5 + $0x18] sm:$0xff]
          %v1286 = vld [vmem:[%s5 + $0x20] sm:$0xff]
          %v1287 = vld [vmem:[%s5 + $0x28] sm:$0xff]
          %v1288 = vld [vmem:[%s5 + $0x30] sm:$0xff]
          %v1289 = vld [vmem:[%s5 + $0x38] sm:$0xff]
          %v1290 = vld [vmem:[%s5 + $0x40] sm:$0xff]
          %v1291 = vld [vmem:[%s5 + $0x48] sm:$0xff]
          %v1292 = vld [vmem:[%s5 + $0x50] sm:$0xff]
          %v1293 = vld [vmem:[%s5 + $0x58] sm:$0xff]
          %v1294 = vld [vmem:[%s5 + $0x60] sm:$0xff]
          %v1295 = vld [vmem:[%s5 + $0x68] sm:$0xff]
          %v1296 = vld [vmem:[%s5 + $0x70] sm:$0xff]
          %v1297 = vld [vmem:[%s5 + $0x78] sm:$0xff]
          %v1298 = vld [vmem:[%s6] sm:$0x1]
          %v1300 = vperm.slane %v1298, 0
          %1302 = vmatpush.msra.mxu0 %v1297
          %1303 = vmatpush.msra.mxu0 %v1296
          %1304 = vmatpush.msra.mxu0 %v1295
          %1305 = vmatpush.msra.mxu0 %v1294
          %1306 = vmatpush.msra.mxu0 %v1293
          %1307 = vmatpush.msra.mxu0 %v1292
          %1308 = vmatpush.msra.mxu0 %v1291
          %1309 = vmatpush.msra.mxu0 %v1290
          %1310 = vmatpush.msra.mxu0 %v1289
          %1311 = vmatpush.msra.mxu0 %v1288
          %1312 = vmatpush.msra.mxu0 %v1287
          %1313 = vmatpush.msra.mxu0 %v1286
          %1314 = vmatpush.msra.mxu0 %v1285
          %1315 = vmatpush.msra.mxu0 %v1284
          %1316 = vmatpush.msra.mxu0 %v1283
          %1317 = vmatpush.msra.mxu0 %v1282
          %1318 = vmatmul.f32.gmra.mxu0 %v1266
          %v1319 = vpop.f32.mrf.mxu0
          %v1320 = vadd.f32 %v1300, %v1319
          %1321 = vmatmul.f32.gmra.mxu0 %v1267
          %v1322 = vpop.f32.mrf.mxu0
          %v1323 = vadd.f32 %v1300, %v1322
          %1324 = vmatmul.f32.gmra.mxu0 %v1268
          %v1325 = vpop.f32.mrf.mxu0
          %v1326 = vadd.f32 %v1300, %v1325
          %1327 = vmatmul.f32.gmra.mxu0 %v1269
          %v1328 = vpop.f32.mrf.mxu0
          %v1329 = vadd.f32 %v1300, %v1328
          %1330 = vmatmul.f32.gmra.mxu0 %v1270
          %v1331 = vpop.f32.mrf.mxu0
          %v1332 = vadd.f32 %v1300, %v1331
          %1333 = vmatmul.f32.gmra.mxu0 %v1271
          %v1334 = vpop.f32.mrf.mxu0
          %v1335 = vadd.f32 %v1300, %v1334
          %1336 = vmatmul.f32.gmra.mxu0 %v1272
          %v1337 = vpop.f32.mrf.mxu0
          %v1338 = vadd.f32 %v1300, %v1337
          %1339 = vmatmul.f32.gmra.mxu0 %v1273
          %v1340 = vpop.f32.mrf.mxu0
          %v1341 = vadd.f32 %v1300, %v1340
          %1342 = vmatmul.f32.gmra.mxu0 %v1274
          %v1343 = vpop.f32.mrf.mxu0
          %v1344 = vadd.f32 %v1300, %v1343
          %1345 = vmatmul.f32.gmra.mxu0 %v1275
          %v1346 = vpop.f32.mrf.mxu0
          %v1347 = vadd.f32 %v1300, %v1346
          %1348 = vmatmul.f32.gmra.mxu0 %v1276
          %v1349 = vpop.f32.mrf.mxu0
          %v1350 = vadd.f32 %v1300, %v1349
          %1351 = vmatmul.f32.gmra.mxu0 %v1277
          %v1352 = vpop.f32.mrf.mxu0
          %v1353 = vadd.f32 %v1300, %v1352
          %1354 = vmatmul.f32.gmra.mxu0 %v1278
          %v1355 = vpop.f32.mrf.mxu0
          %v1356 = vadd.f32 %v1300, %v1355
          %1357 = vmatmul.f32.gmra.mxu0 %v1279
          %v1358 = vpop.f32.mrf.mxu0
          %v1359 = vadd.f32 %v1300, %v1358
          %1360 = vmatmul.f32.gmra.mxu0 %v1280
          %v1361 = vpop.f32.mrf.mxu0
          %v1362 = vadd.f32 %v1300, %v1361
          %1363 = vmatmul.f32.gmra.mxu0 %v1281
          %v1364 = vpop.f32.mrf.mxu0
          %v1365 = vadd.f32 %v1300, %v1364
          %1366 = vdwg.mxu0
          %1367 = vst [vmem:[%s443] sm:$0xff] %v1320
          %1368 = vst [vmem:[%s443 + $0x8] sm:$0xff] %v1323
          %1369 = vst [vmem:[%s443 + $0x10] sm:$0xff] %v1326
          %1370 = vst [vmem:[%s443 + $0x18] sm:$0xff] %v1329
          %1371 = vst [vmem:[%s443 + $0x20] sm:$0xff] %v1332
          %1372 = vst [vmem:[%s443 + $0x28] sm:$0xff] %v1335
          %1373 = vst [vmem:[%s443 + $0x30] sm:$0xff] %v1338
          %1374 = vst [vmem:[%s443 + $0x38] sm:$0xff] %v1341
          %1375 = vst [vmem:[%s443 + $0x40] sm:$0xff] %v1344
          %1376 = vst [vmem:[%s443 + $0x48] sm:$0xff] %v1347
          %1377 = vst [vmem:[%s443 + $0x50] sm:$0xff] %v1350
          %1378 = vst [vmem:[%s443 + $0x58] sm:$0xff] %v1353
          %1379 = vst [vmem:[%s443 + $0x60] sm:$0xff] %v1356
          %1380 = vst [vmem:[%s443 + $0x68] sm:$0xff] %v1359
          %1381 = vst [vmem:[%s443 + $0x70] sm:$0xff] %v1362
          %1382 = vst [vmem:[%s443 + $0x78] sm:$0xff] %v1365
        $region97: #{sage_classifier_forward.1} parent=84 // pred_fallthru
          _
        %s1383 = smul.u32 16, %s22
        %p1384 = scmp.lt.s32.totalorder %s1383, 31
        %s1385 = scalar_select %p1384, %s1383, 31
        %s1386 = smul.addr %s1385, 8
        %s1387 = scalar_lea.vmem %s7, %s1386
        // Predicated region
        $region98: #{sage_classifier_forward.1} parent=84 // pred_check
          %p1388 = pneg %p212
        $region99: #{sage_classifier_forward.1} parent=84 // pred_check_branch
          %1390 = sbr.rel (%p1388) target = $region101
        $region100: #{sage_classifier_forward.1} parent=84 // pred_region
          %s1391 = smul.u32 16, %s22
        $region101: #{sage_classifier_forward.1} parent=84 // pred_fallthru
          _
      $region85: #{sage_classifier_forward.1} parent=5 // pred_fallthru
        _
      %p1392 = scmp.le.s32.totalorder 2, %s13
      // Predicated region
      $region102: #{sage_classifier_forward.1} parent=5 // pred_check
        %p1393 = pneg %p1392
      $region103: #{sage_classifier_forward.1} parent=5 // pred_check_branch
        %1395 = sbr.rel (%p1393) target = $region105
      $region104: #{sage_classifier_forward.1} parent=5 // pred_region
        %s1396 = ssub.s32 %s13, 2
        // Predicated region
        $region106: #{sage_classifier_forward.1} parent=104 // pred_check
          %p1397 = pneg %p218
        $region107: #{sage_classifier_forward.1} parent=104 // pred_check_branch
          %1399 = sbr.rel (%p1397) target = $region109
        $region108: #{sage_classifier_forward.1} parent=104 // pred_region
          %s1400 = smul.u32 16, %s24
          %p1401 = scmp.lt.s32.totalorder %s1400, 31
          %s1402 = scalar_select %p1401, %s1400, 31
          %s1403 = smul.addr %s1402, 8
          %s1404 = scalar_lea.vmem %s7, %s1403
        $region109: #{sage_classifier_forward.1} parent=104 // pred_fallthru
          _
      $region105: #{sage_classifier_forward.1} parent=5 // pred_fallthru
        _
    $region6: #{sage_classifier_forward.1} parent=1 // loop_footer
      %s17 = sadd.s32 1, %s13
    $region7: #{sage_classifier_forward.1} parent=1 // loop_footer_branch
      %12 = sbr.rel target = $region3
    $region8: #{sage_classifier_forward.1} parent=1 // loop_exit
      _

</llo_original>
